<compile_context>
chip_gen: v6e
topology: v6e:2x2x1
jax: 0.10.0
libtpu: 0.0.40
codegen_flags: <defaults>
</compile_context>

<pallas_src>
import functools

import jax
import jax.numpy as jnp
from jax.experimental import pallas as pl
from jax.experimental.pallas import tpu as pltpu


def _postprocess_kernel(x_ref, tr_ref, ti_ref, cw_ref, m_ref,
                        mhr_ref, mhi_ref, mhs_ref,
                        mwtr_ref, mwti_ref, mwts_ref,
                        kr_ref, ki_ref, cr_ref, ci_ref, img_ref,
                        *rss_sq_ref, left, top, res):
    """One coil per grid step.

    x_ref   : (1, 2, H, W_pad) raw network-output block (width crop fused here)
    tr/ti   : (1, H, W) target real/imag planes
    cw/m    : (1, W) column coefficients: (1-mask)/weighting and mask
    mh*/mwt*: centered-IDFT matrices (bf16), Gauss-trick triplets
    outputs : kr/ki (f32), cr/ci (bf16), img (bf16)
              [+ optional (1, res, W) row-cropped |cmg|^2 for the RSS path]
    """
    tw = tr_ref.shape[-1]

    # Fused width-crop + weighting + mask-replace:  k = x*(1-m)/w + target*m.
    cw = cw_ref[...]                        # (1, W) -> sublane broadcast
    m = m_ref[...]
    xr = x_ref[0, 0, :, left:left + tw]     # static lane slice (crop in-kernel)
    xi = x_ref[0, 1, :, left:left + tw]
    kr = xr * cw + tr_ref[0] * m
    ki = xi * cw + ti_ref[0] * m
    kr_ref[0] = kr
    ki_ref[0] = ki

    dot = functools.partial(jnp.dot, preferred_element_type=jnp.float32)

    # Centered, orthonormal 2-D inverse DFT:  Y = M_H @ K @ M_W^T (complex).
    # Gauss 3-multiply complex matmul per stage; bf16 operands, f32 accum.
    kr_b = kr.astype(jnp.bfloat16)
    ki_b = ki.astype(jnp.bfloat16)
    ks_b = (kr + ki).astype(jnp.bfloat16)
    t1 = dot(mhr_ref[...], kr_b)
    t2 = dot(mhi_ref[...], ki_b)
    t3 = dot(mhs_ref[...], ks_b)
    t_r = t1 - t2
    t_i = t3 - t1 - t2

    tr_b = t_r.astype(jnp.bfloat16)
    ti_b = t_i.astype(jnp.bfloat16)
    ts_b = (t_r + t_i).astype(jnp.bfloat16)
    u1 = dot(tr_b, mwtr_ref[...])
    u2 = dot(ti_b, mwti_ref[...])
    u3 = dot(ts_b, mwts_ref[...])
    yr = u1 - u2
    yi = u3 - u1 - u2

    cr_ref[0] = yr.astype(cr_ref.dtype)
    ci_ref[0] = yi.astype(ci_ref.dtype)
    mag2 = yr * yr + yi * yi
    img_ref[0] = jnp.sqrt(mag2).astype(img_ref.dtype)

    if rss_sq_ref:
        # Per-coil row-cropped |cmg|^2.  Lane crop + coil sum + sqrt happen once
        # in XLA so the coil grid axis stays megacore-parallel on v7x.
        rss_sq_ref[0][0] = mag2[top:top + res, :]


def _centered_idft_matrix(n):
    """Matrix M s.t.  M @ x == fftshift(ifft(ifftshift(x), norm='ortho'))."""
    eye = jnp.eye(n, dtype=jnp.complex64)
    m = jnp.fft.ifftshift(eye, axes=0)
    m = jnp.fft.ifft(m, axis=0, norm="ortho")
    m = jnp.fft.fftshift(m, axes=0)
    return m


def _vmem_capacity_bytes():
    try:
        return int(pltpu.get_tpu_info().vmem_capacity_bytes)
    except Exception:
        return 64 << 20            # conservative (v7x-like) fallback


def _coil_in_spec(shape, index_map, n_buffers):
    """Coil-blocked input spec, optionally with deeper pipelining."""
    if n_buffers > 2 and hasattr(pl, "Buffered"):
        try:
            return pl.BlockSpec(shape, index_map,
                                pipeline_mode=pl.Buffered(n_buffers))
        except Exception:
            pass
    return pl.BlockSpec(shape, index_map)


def post_process_wk(kspace_outputs, kspace_targets, weightings, masks, *,
                    weighted=True, replace=True, residual_acs=False,
                    resolution=320):
    if kspace_outputs.shape[0] > 1:
        raise NotImplementedError("Only one slice at a time for now.")
    if residual_acs:
        # TODO(synk): residual_acs branch (ACS-line residual add) not implemented; default is False.
        raise NotImplementedError("residual_acs not implemented")

    n, c2, h, w_pad = kspace_outputs.shape
    _, coils, th, tw, two = kspace_targets.shape
    assert two == 2 and c2 == 2 * coils and th == h
    assert h % 2 == 0 and tw % 2 == 0, "Even side lengths expected."

    left = (w_pad - tw) // 2

    # Free reshape: NCHW (1, 2C, H, Wp) -> (C, 2, H, Wp); width crop is done
    # inside the kernel, so no XLA crop/copy pass over the network output.
    x4 = kspace_outputs.reshape(coils, 2, h, w_pad).astype(jnp.float32)

    # Targets split into planar real/imag planes (layout plumbing only).
    tg = kspace_targets[0].astype(jnp.float32)        # (C, H, W, 2)
    tgr = tg[..., 0]
    tgi = tg[..., 1]

    # Column-only weighting/mask folded into 1-D coefficient vectors.
    # TODO(synk): assumes weightings/masks broadcast from shape (1,1,1,W,1).
    if weighted:
        w1d = jnp.broadcast_to(weightings, (1, 1, 1, tw, 1))[0, 0, 0, :, 0]
        w1d = w1d.astype(jnp.float32)
    else:
        w1d = jnp.ones((tw,), jnp.float32)
    if replace:
        m1d = jnp.broadcast_to(masks, (1, 1, 1, tw, 1))[0, 0, 0, :, 0]
        m1d = m1d.astype(jnp.float32)
    else:
        m1d = jnp.zeros((tw,), jnp.float32)
    # Note: (1-m)/w is NaN where w==0 inside the sampled region -- matches the
    # reference's inf*0 behaviour.
    cw1d = ((1.0 - m1d) / w1d).reshape(1, tw)
    m1d = m1d.reshape(1, tw)

    # Centered orthonormal inverse DFT matrices + Gauss-trick sums, bf16.
    mh = _centered_idft_matrix(h)
    mwt = _centered_idft_matrix(tw).T
    mhr = jnp.real(mh).astype(jnp.float32)
    mhi = jnp.imag(mh).astype(jnp.float32)
    mwtr = jnp.real(mwt).astype(jnp.float32)
    mwti = jnp.imag(mwt).astype(jnp.float32)
    mhs = (mhr + mhi).astype(jnp.bfloat16)
    mwts = (mwtr + mwti).astype(jnp.bfloat16)
    mhr_b = mhr.astype(jnp.bfloat16)
    mhi_b = mhi.astype(jnp.bfloat16)
    mwtr_b = mwtr.astype(jnp.bfloat16)
    mwti_b = mwti.astype(jnp.bfloat16)

    emit_rss = (coils == 15)
    if emit_rss:
        assert h >= resolution and tw >= resolution, "RSS crop larger than image."
    top = (h - resolution) // 2 if emit_rss else 0
    lft = (tw - resolution) // 2 if emit_rss else 0

    vmem_cap = _vmem_capacity_bytes()
    big_vmem = vmem_cap >= (100 << 20)          # v5e/v6e: 128 MiB; v7x: 64 MiB
    n_buffers = 3 if big_vmem else 2            # deeper pipelining when cheap

    x_spec = _coil_in_spec((1, 2, h, w_pad), lambda c: (c, 0, 0, 0), n_buffers)
    t_spec = _coil_in_spec((1, h, tw), lambda c: (c, 0, 0), n_buffers)
    coil_out = pl.BlockSpec((1, h, tw), lambda c: (c, 0, 0))
    # Grid-invariant operands: whole-array, single-buffered VMEM residents.
    vmem_full = pl.BlockSpec(memory_space=pltpu.MemorySpace.VMEM)

    out_shapes = [
        jax.ShapeDtypeStruct((coils, h, tw), jnp.float32),    # kr
        jax.ShapeDtypeStruct((coils, h, tw), jnp.float32),    # ki
        jax.ShapeDtypeStruct((coils, h, tw), jnp.bfloat16),   # cmg real
        jax.ShapeDtypeStruct((coils, h, tw), jnp.bfloat16),   # cmg imag
        jax.ShapeDtypeStruct((coils, h, tw), jnp.bfloat16),   # |cmg|
    ]
    out_specs = [coil_out] * 5
    if emit_rss:
        out_shapes.append(
            jax.ShapeDtypeStruct((coils, resolution, tw), jnp.float32))
        out_specs.append(pl.BlockSpec((1, resolution, tw), lambda c: (c, 0, 0)))

    # Explicit VMEM budget: pipelined blocks + residents + live f32 temporaries.
    plane = h * tw * 4
    in_block = 2 * h * w_pad * 4 + 2 * plane
    out_block = 2 * plane + 3 * (plane // 2) \
        + (resolution * tw * 4 if emit_rss else 0)
    resident = 3 * h * h * 2 + 3 * tw * tw * 2 + 2 * 8 * max(tw, 128) * 4
    vmem_est = n_buffers * in_block + 2 * out_block + resident + 10 * plane
    vmem_cap_limit = (96 << 20) if big_vmem else (48 << 20)
    vmem_limit = int(min(max(vmem_est + (4 << 20), 32 << 20), vmem_cap_limit))

    flops = 6 * h * tw * (h + tw) * coils                 # 6 matmuls/coil (Gauss)
    cost = pl.CostEstimate(
        flops=flops,
        transcendentals=coils * h * tw,
        bytes_accessed=coils * (in_block + out_block) + resident)

    outs = pl.pallas_call(
        functools.partial(_postprocess_kernel, left=left, top=top,
                          res=resolution),
        out_shape=tuple(out_shapes),
        grid_spec=pltpu.PrefetchScalarGridSpec(
            num_scalar_prefetch=0,
            grid=(coils,),
            in_specs=[x_spec, t_spec, t_spec,
                      vmem_full, vmem_full,
                      vmem_full, vmem_full, vmem_full,
                      vmem_full, vmem_full, vmem_full],
            out_specs=out_specs,
        ),
        compiler_params=pltpu.CompilerParams(
            dimension_semantics=("parallel",),
            vmem_limit_bytes=vmem_limit),
        cost_estimate=cost,
    )(x4, tgr, tgi, cw1d, m1d, mhr_b, mhi_b, mhs, mwtr_b, mwti_b, mwts)

    if emit_rss:
        kr, ki, cr, ci, img, sq = outs
    else:
        kr, ki, cr, ci, img = outs

    # Re-pack to the PyTorch k-space convention (layout plumbing only).
    kspace_recons = jnp.stack([kr, ki], axis=-1)[None]    # (1, C, H, W, 2) f32
    cmg_recons = jnp.stack([cr, ci], axis=-1)[None]       # (1, C, H, W, 2) bf16
    img_recons = img[None]                                # (1, C, H, W)    bf16

    recons = {"kspace_recons": kspace_recons,
              "cmg_recons": cmg_recons,
              "img_recons": img_recons}

    if emit_rss:
        # Lane crop applied once, f32 sum over coils, sqrt -> (R, R).
        sq_crop = sq[:, :, lft:lft + resolution]
        recons["rss_recons"] = jnp.sqrt(
            jnp.sum(sq_crop, axis=0, dtype=jnp.float32))

    return recons


def _reference(kspace_outputs, kspace_targets, weightings, masks, resolution):
    """Plain-JAX reference of the forward pass for verification."""
    n, c2, h, w_pad = kspace_outputs.shape
    coils = c2 // 2
    tw = kspace_targets.shape[-2]
    left = (w_pad - tw) // 2
    k = kspace_outputs[..., left:left + tw].reshape(1, coils, 2, h, tw)
    kc = k[:, :, 0] + 1j * k[:, :, 1]                       # (1, C, H, W)
    tc = kspace_targets[..., 0] + 1j * kspace_targets[..., 1]
    w_b = weightings[0, 0, 0, :, 0]
    m_b = masks[0, 0, 0, :, 0]
    kc = kc / w_b
    kc = kc * (1.0 - m_b) + tc * m_b
    cmg = jnp.fft.fftshift(
        jnp.fft.ifft2(jnp.fft.ifftshift(kc, axes=(-2, -1)),
                      axes=(-2, -1), norm="ortho"),
        axes=(-2, -1))
    img = jnp.abs(cmg)
    out = {"kspace_recons": jnp.stack([jnp.real(kc), jnp.imag(kc)], axis=-1),
           "cmg_recons": jnp.stack([jnp.real(cmg), jnp.imag(cmg)], axis=-1),
           "img_recons": img}
    if img.shape[1] == 15:
        top = (img.shape[-2] - resolution) // 2
        lft = (img.shape[-1] - resolution) // 2
        crop = img[:, :, top:top + resolution, lft:lft + resolution]
        out["rss_recons"] = jnp.sqrt(jnp.sum(crop ** 2, axis=1)).squeeze()
    return out


if __name__ == "__main__":
    # --- Test 1: 15-coil case (triggers fused RSS path), tiny square planes. ---
    coils, H, W, W_pad = 15, 16, 16, 24
    resolution = 16

    key = jax.random.PRNGKey(0)
    k1, k2, k3 = jax.random.split(key, 3)
    kspace_outputs = jax.random.normal(k1, (1, 2 * coils, H, W_pad),
                                       dtype=jnp.float32)
    kspace_targets = jax.random.normal(k2, (1, coils, H, W, 2),
                                       dtype=jnp.float32)
    weightings = 1.0 + jax.random.uniform(k3, (1, 1, 1, W, 1),
                                          dtype=jnp.float32)
    cols = jnp.arange(W)
    mask_1d = ((cols % 4 == 0) |
               ((cols >= W // 2 - 2) & (cols < W // 2 + 2))).astype(jnp.float32)
    masks = mask_1d.reshape(1, 1, 1, W, 1)

    recons = post_process_wk(kspace_outputs, kspace_targets, weightings, masks,
                             weighted=True, replace=True, residual_acs=False,
                             resolution=resolution)
    recons = jax.tree_util.tree_map(jax.block_until_ready, recons)
    ref = _reference(kspace_outputs, kspace_targets, weightings, masks,
                     resolution)

    # k-space path is purely elementwise f32 -> tight tolerance.
    assert jnp.allclose(recons["kspace_recons"], ref["kspace_recons"],
                        atol=1e-5, rtol=1e-5)
    # IFFT via bf16 MXU matmuls (Gauss trick) + bf16 storage -> relaxed tol.
    assert jnp.allclose(recons["cmg_recons"].astype(jnp.float32),
                        ref["cmg_recons"], atol=1e-1, rtol=1e-1)
    assert jnp.allclose(recons["img_recons"].astype(jnp.float32),
                        ref["img_recons"], atol=1e-1, rtol=1e-1)
    assert jnp.allclose(recons["rss_recons"], ref["rss_recons"],
                        atol=1e-1, rtol=1e-1)

    # --- Test 2: non-15-coil case with ragged (non-128-multiple) width. ---
    coils2, H2, W2, W_pad2 = 3, 16, 144, 160
    j1, j2, j3 = jax.random.split(jax.random.PRNGKey(1), 3)
    kspace_outputs2 = jax.random.normal(j1, (1, 2 * coils2, H2, W_pad2),
                                        dtype=jnp.float32)
    kspace_targets2 = jax.random.normal(j2, (1, coils2, H2, W2, 2),
                                        dtype=jnp.float32)
    weightings2 = 1.0 + jax.random.uniform(j3, (1, 1, 1, W2, 1),
                                           dtype=jnp.float32)
    cols2 = jnp.arange(W2)
    mask2_1d = ((cols2 % 4 == 0) |
                ((cols2 >= W2 // 2 - 6) &
                 (cols2 < W2 // 2 + 6))).astype(jnp.float32)
    masks2 = mask2_1d.reshape(1, 1, 1, W2, 1)

    recons2 = post_process_wk(kspace_outputs2, kspace_targets2, weightings2,
                              masks2, resolution=16)
    recons2 = jax.tree_util.tree_map(jax.block_until_ready, recons2)
    ref2 = _reference(kspace_outputs2, kspace_targets2, weightings2, masks2, 16)

    assert jnp.allclose(recons2["kspace_recons"], ref2["kspace_recons"],
                        atol=1e-5, rtol=1e-5)
    assert jnp.allclose(recons2["cmg_recons"].astype(jnp.float32),
                        ref2["cmg_recons"], atol=1e-1, rtol=1e-1)
    assert jnp.allclose(recons2["img_recons"].astype(jnp.float32),
                        ref2["img_recons"], atol=1e-1, rtol=1e-1)
    assert "rss_recons" not in recons2

    print("KERNEL_OK")
</pallas_src>

<mosaic_0001>
module attributes {stable_mosaic.version = 11 : i64} {
  func.func @_postprocess_kernel(%arg0: i32, %arg1: memref<1x2x16x24xf32, #tpu.memory_space<vmem>>, %arg2: memref<1x16x16xf32, #tpu.memory_space<vmem>>, %arg3: memref<1x16x16xf32, #tpu.memory_space<vmem>>, %arg4: memref<1x16xf32, #tpu.memory_space<vmem>>, %arg5: memref<1x16xf32, #tpu.memory_space<vmem>>, %arg6: memref<16x16xbf16, #tpu.memory_space<vmem>>, %arg7: memref<16x16xbf16, #tpu.memory_space<vmem>>, %arg8: memref<16x16xbf16, #tpu.memory_space<vmem>>, %arg9: memref<16x16xbf16, #tpu.memory_space<vmem>>, %arg10: memref<16x16xbf16, #tpu.memory_space<vmem>>, %arg11: memref<16x16xbf16, #tpu.memory_space<vmem>>, %arg12: memref<1x16x16xf32, #tpu.memory_space<vmem>>, %arg13: memref<1x16x16xf32, #tpu.memory_space<vmem>>, %arg14: memref<1x16x16xbf16, #tpu.memory_space<vmem>>, %arg15: memref<1x16x16xbf16, #tpu.memory_space<vmem>>, %arg16: memref<1x16x16xbf16, #tpu.memory_space<vmem>>, %arg17: memref<1x16x16xf32, #tpu.memory_space<vmem>>) attributes {dimension_semantics = [#tpu.dimension_semantics<parallel>], iteration_bounds = array<i64: 15>, scalar_prefetch = 0 : i64, scratch_operands = 0 : i64, tpu.core_type = #tpu.core_type<tc>, window_params = [{transform_indices = @transform_0, window_bounds = array<i64: 1, 2, 16, 24>}, {transform_indices = @transform_1, window_bounds = array<i64: 1, 16, 16>}, {transform_indices = @transform_2, window_bounds = array<i64: 1, 16, 16>}, {pipeline_mode = #tpu.pipeline_mode<synchronous>, transform_indices = @transform_3, window_bounds = array<i64: 1, 16>}, {pipeline_mode = #tpu.pipeline_mode<synchronous>, transform_indices = @transform_4, window_bounds = array<i64: 1, 16>}, {pipeline_mode = #tpu.pipeline_mode<synchronous>, transform_indices = @transform_5, window_bounds = array<i64: 16, 16>}, {pipeline_mode = #tpu.pipeline_mode<synchronous>, transform_indices = @transform_6, window_bounds = array<i64: 16, 16>}, {pipeline_mode = #tpu.pipeline_mode<synchronous>, transform_indices = @transform_7, window_bounds = array<i64: 16, 16>}, {pipeline_mode = #tpu.pipeline_mode<synchronous>, transform_indices = @transform_8, window_bounds = array<i64: 16, 16>}, {pipeline_mode = #tpu.pipeline_mode<synchronous>, transform_indices = @transform_9, window_bounds = array<i64: 16, 16>}, {pipeline_mode = #tpu.pipeline_mode<synchronous>, transform_indices = @transform_10, window_bounds = array<i64: 16, 16>}, {transform_indices = @transform_11, window_bounds = array<i64: 1, 16, 16>}, {transform_indices = @transform_12, window_bounds = array<i64: 1, 16, 16>}, {transform_indices = @transform_13, window_bounds = array<i64: 1, 16, 16>}, {transform_indices = @transform_14, window_bounds = array<i64: 1, 16, 16>}, {transform_indices = @transform_15, window_bounds = array<i64: 1, 16, 16>}, {transform_indices = @transform_16, window_bounds = array<i64: 1, 16, 16>}]} {
    %c0 = arith.constant 0 : index
    %c0_0 = arith.constant 0 : index
    %0 = vector.load %arg4[%c0, %c0_0] : memref<1x16xf32, #tpu.memory_space<vmem>>, vector<1x16xf32>
    %c0_1 = arith.constant 0 : index
    %c0_2 = arith.constant 0 : index
    %1 = vector.load %arg5[%c0_1, %c0_2] : memref<1x16xf32, #tpu.memory_space<vmem>>, vector<1x16xf32>
    %c0_3 = arith.constant 0 : index
    %c0_4 = arith.constant 0 : index
    %c0_5 = arith.constant 0 : index
    %c4 = arith.constant 4 : index
    %2 = vector.load %arg1[%c0_3, %c0_4, %c0_5, %c4] : memref<1x2x16x24xf32, #tpu.memory_space<vmem>>, vector<1x1x16x16xf32>
    %3 = vector.shape_cast %2 : vector<1x1x16x16xf32> to vector<16x16xf32>
    %c0_6 = arith.constant 0 : index
    %c1 = arith.constant 1 : index
    %c0_7 = arith.constant 0 : index
    %c4_8 = arith.constant 4 : index
    %4 = vector.load %arg1[%c0_6, %c1, %c0_7, %c4_8] : memref<1x2x16x24xf32, #tpu.memory_space<vmem>>, vector<1x1x16x16xf32>
    %5 = vector.shape_cast %4 : vector<1x1x16x16xf32> to vector<16x16xf32>
    %6 = vector.broadcast %0 : vector<1x16xf32> to vector<16x16xf32>
    %7 = arith.mulf %3, %6 : vector<16x16xf32>
    %c0_9 = arith.constant 0 : index
    %c0_10 = arith.constant 0 : index
    %c0_11 = arith.constant 0 : index
    %8 = vector.load %arg2[%c0_9, %c0_10, %c0_11] : memref<1x16x16xf32, #tpu.memory_space<vmem>>, vector<1x16x16xf32>
    %9 = vector.shape_cast %8 : vector<1x16x16xf32> to vector<16x16xf32>
    %10 = vector.broadcast %1 : vector<1x16xf32> to vector<16x16xf32>
    %11 = arith.mulf %9, %10 : vector<16x16xf32>
    %12 = arith.addf %7, %11 : vector<16x16xf32>
    %13 = vector.broadcast %0 : vector<1x16xf32> to vector<16x16xf32>
    %14 = arith.mulf %5, %13 : vector<16x16xf32>
    %c0_12 = arith.constant 0 : index
    %c0_13 = arith.constant 0 : index
    %c0_14 = arith.constant 0 : index
    %15 = vector.load %arg3[%c0_12, %c0_13, %c0_14] : memref<1x16x16xf32, #tpu.memory_space<vmem>>, vector<1x16x16xf32>
    %16 = vector.shape_cast %15 : vector<1x16x16xf32> to vector<16x16xf32>
    %17 = vector.broadcast %1 : vector<1x16xf32> to vector<16x16xf32>
    %18 = arith.mulf %16, %17 : vector<16x16xf32>
    %19 = arith.addf %14, %18 : vector<16x16xf32>
    %c0_15 = arith.constant 0 : index
    %c0_16 = arith.constant 0 : index
    %c0_17 = arith.constant 0 : index
    %20 = vector.load %arg12[%c0_15, %c0_16, %c0_17] : memref<1x16x16xf32, #tpu.memory_space<vmem>>, vector<1x16x16xf32>
    %21 = vector.shape_cast %20 : vector<1x16x16xf32> to vector<16x16xf32>
    %22 = vector.shape_cast %12 : vector<16x16xf32> to vector<1x16x16xf32>
    tpu.vector_store %arg12[%c0_15, %c0_16, %c0_17], %22 {strides = array<i32>} : memref<1x16x16xf32, #tpu.memory_space<vmem>>, vector<1x16x16xf32>,
    %c0_18 = arith.constant 0 : index
    %c0_19 = arith.constant 0 : index
    %c0_20 = arith.constant 0 : index
    %23 = vector.load %arg13[%c0_18, %c0_19, %c0_20] : memref<1x16x16xf32, #tpu.memory_space<vmem>>, vector<1x16x16xf32>
    %24 = vector.shape_cast %23 : vector<1x16x16xf32> to vector<16x16xf32>
    %25 = vector.shape_cast %19 : vector<16x16xf32> to vector<1x16x16xf32>
    tpu.vector_store %arg13[%c0_18, %c0_19, %c0_20], %25 {strides = array<i32>} : memref<1x16x16xf32, #tpu.memory_space<vmem>>, vector<1x16x16xf32>,
    %26 = arith.truncf %12 : vector<16x16xf32> to vector<16x16xbf16>
    %27 = arith.truncf %19 : vector<16x16xf32> to vector<16x16xbf16>
    %28 = arith.addf %12, %19 : vector<16x16xf32>
    %29 = arith.truncf %28 : vector<16x16xf32> to vector<16x16xbf16>
    %c0_21 = arith.constant 0 : index
    %c0_22 = arith.constant 0 : index
    %30 = vector.load %arg6[%c0_21, %c0_22] : memref<16x16xbf16, #tpu.memory_space<vmem>>, vector<16x16xbf16>
    %cst = arith.constant dense<0.000000e+00> : vector<16x16xf32>
    %31 = tpu.matmul %30, %26, %cst {dimension_numbers = #tpu.dot_dimension_numbers<[1], [0], [0], [1], [0, 0, 1, 1], [], []>} : vector<16x16xbf16>, vector<16x16xbf16>, vector<16x16xf32> -> vector<16x16xf32>
    %c0_23 = arith.constant 0 : index
    %c0_24 = arith.constant 0 : index
    %32 = vector.load %arg7[%c0_23, %c0_24] : memref<16x16xbf16, #tpu.memory_space<vmem>>, vector<16x16xbf16>
    %cst_25 = arith.constant dense<0.000000e+00> : vector<16x16xf32>
    %33 = tpu.matmul %32, %27, %cst_25 {dimension_numbers = #tpu.dot_dimension_numbers<[1], [0], [0], [1], [0, 0, 1, 1], [], []>} : vector<16x16xbf16>, vector<16x16xbf16>, vector<16x16xf32> -> vector<16x16xf32>
    %c0_26 = arith.constant 0 : index
    %c0_27 = arith.constant 0 : index
    %34 = vector.load %arg8[%c0_26, %c0_27] : memref<16x16xbf16, #tpu.memory_space<vmem>>, vector<16x16xbf16>
    %cst_28 = arith.constant dense<0.000000e+00> : vector<16x16xf32>
    %35 = tpu.matmul %34, %29, %cst_28 {dimension_numbers = #tpu.dot_dimension_numbers<[1], [0], [0], [1], [0, 0, 1, 1], [], []>} : vector<16x16xbf16>, vector<16x16xbf16>, vector<16x16xf32> -> vector<16x16xf32>
    %36 = arith.subf %31, %33 : vector<16x16xf32>
    %37 = arith.subf %35, %31 : vector<16x16xf32>
    %38 = arith.subf %37, %33 : vector<16x16xf32>
    %39 = arith.truncf %36 : vector<16x16xf32> to vector<16x16xbf16>
    %40 = arith.truncf %38 : vector<16x16xf32> to vector<16x16xbf16>
    %41 = arith.addf %36, %38 : vector<16x16xf32>
    %42 = arith.truncf %41 : vector<16x16xf32> to vector<16x16xbf16>
    %c0_29 = arith.constant 0 : index
    %c0_30 = arith.constant 0 : index
    %43 = vector.load %arg9[%c0_29, %c0_30] : memref<16x16xbf16, #tpu.memory_space<vmem>>, vector<16x16xbf16>
    %cst_31 = arith.constant dense<0.000000e+00> : vector<16x16xf32>
    %44 = tpu.matmul %39, %43, %cst_31 {dimension_numbers = #tpu.dot_dimension_numbers<[1], [0], [0], [1], [0, 0, 1, 1], [], []>} : vector<16x16xbf16>, vector<16x16xbf16>, vector<16x16xf32> -> vector<16x16xf32>
    %c0_32 = arith.constant 0 : index
    %c0_33 = arith.constant 0 : index
    %45 = vector.load %arg10[%c0_32, %c0_33] : memref<16x16xbf16, #tpu.memory_space<vmem>>, vector<16x16xbf16>
    %cst_34 = arith.constant dense<0.000000e+00> : vector<16x16xf32>
    %46 = tpu.matmul %40, %45, %cst_34 {dimension_numbers = #tpu.dot_dimension_numbers<[1], [0], [0], [1], [0, 0, 1, 1], [], []>} : vector<16x16xbf16>, vector<16x16xbf16>, vector<16x16xf32> -> vector<16x16xf32>
    %c0_35 = arith.constant 0 : index
    %c0_36 = arith.constant 0 : index
    %47 = vector.load %arg11[%c0_35, %c0_36] : memref<16x16xbf16, #tpu.memory_space<vmem>>, vector<16x16xbf16>
    %cst_37 = arith.constant dense<0.000000e+00> : vector<16x16xf32>
    %48 = tpu.matmul %42, %47, %cst_37 {dimension_numbers = #tpu.dot_dimension_numbers<[1], [0], [0], [1], [0, 0, 1, 1], [], []>} : vector<16x16xbf16>, vector<16x16xbf16>, vector<16x16xf32> -> vector<16x16xf32>
    %49 = arith.subf %44, %46 : vector<16x16xf32>
    %50 = arith.subf %48, %44 : vector<16x16xf32>
    %51 = arith.subf %50, %46 : vector<16x16xf32>
    %52 = arith.truncf %49 : vector<16x16xf32> to vector<16x16xbf16>
    %c0_38 = arith.constant 0 : index
    %c0_39 = arith.constant 0 : index
    %c0_40 = arith.constant 0 : index
    %53 = vector.load %arg14[%c0_38, %c0_39, %c0_40] : memref<1x16x16xbf16, #tpu.memory_space<vmem>>, vector<1x16x16xbf16>
    %54 = vector.shape_cast %53 : vector<1x16x16xbf16> to vector<16x16xbf16>
    %55 = vector.shape_cast %52 : vector<16x16xbf16> to vector<1x16x16xbf16>
    tpu.vector_store %arg14[%c0_38, %c0_39, %c0_40], %55 {strides = array<i32>} : memref<1x16x16xbf16, #tpu.memory_space<vmem>>, vector<1x16x16xbf16>,
    %56 = arith.truncf %51 : vector<16x16xf32> to vector<16x16xbf16>
    %c0_41 = arith.constant 0 : index
    %c0_42 = arith.constant 0 : index
    %c0_43 = arith.constant 0 : index
    %57 = vector.load %arg15[%c0_41, %c0_42, %c0_43] : memref<1x16x16xbf16, #tpu.memory_space<vmem>>, vector<1x16x16xbf16>
    %58 = vector.shape_cast %57 : vector<1x16x16xbf16> to vector<16x16xbf16>
    %59 = vector.shape_cast %56 : vector<16x16xbf16> to vector<1x16x16xbf16>
    tpu.vector_store %arg15[%c0_41, %c0_42, %c0_43], %59 {strides = array<i32>} : memref<1x16x16xbf16, #tpu.memory_space<vmem>>, vector<1x16x16xbf16>,
    %60 = arith.mulf %49, %49 : vector<16x16xf32>
    %61 = arith.mulf %51, %51 : vector<16x16xf32>
    %62 = arith.addf %60, %61 : vector<16x16xf32>
    %63 = math.sqrt %62 : vector<16x16xf32>
    %64 = arith.truncf %63 : vector<16x16xf32> to vector<16x16xbf16>
    %c0_44 = arith.constant 0 : index
    %c0_45 = arith.constant 0 : index
    %c0_46 = arith.constant 0 : index
    %65 = vector.load %arg16[%c0_44, %c0_45, %c0_46] : memref<1x16x16xbf16, #tpu.memory_space<vmem>>, vector<1x16x16xbf16>
    %66 = vector.shape_cast %65 : vector<1x16x16xbf16> to vector<16x16xbf16>
    %67 = vector.shape_cast %64 : vector<16x16xbf16> to vector<1x16x16xbf16>
    tpu.vector_store %arg16[%c0_44, %c0_45, %c0_46], %67 {strides = array<i32>} : memref<1x16x16xbf16, #tpu.memory_space<vmem>>, vector<1x16x16xbf16>,
    %c0_47 = arith.constant 0 : index
    %c0_48 = arith.constant 0 : index
    %c0_49 = arith.constant 0 : index
    %68 = vector.load %arg17[%c0_47, %c0_48, %c0_49] : memref<1x16x16xf32, #tpu.memory_space<vmem>>, vector<1x16x16xf32>
    %69 = vector.shape_cast %68 : vector<1x16x16xf32> to vector<16x16xf32>
    %70 = vector.shape_cast %62 : vector<16x16xf32> to vector<1x16x16xf32>
    tpu.vector_store %arg17[%c0_47, %c0_48, %c0_49], %70 {strides = array<i32>} : memref<1x16x16xf32, #tpu.memory_space<vmem>>, vector<1x16x16xf32>,
    return
  }
  func.func @transform_0(%arg0: i32) -> (i32, i32, i32, i32) {
    %c0_i32 = arith.constant 0 : i32
    %c0_i32_0 = arith.constant 0 : i32
    %c0_i32_1 = arith.constant 0 : i32
    %c0_i32_2 = arith.constant 0 : i32
    return %arg0, %c0_i32, %c0_i32_0, %c0_i32_1 : i32, i32, i32, i32
  }
  func.func @transform_1(%arg0: i32) -> (i32, i32, i32) {
    %c0_i32 = arith.constant 0 : i32
    %c0_i32_0 = arith.constant 0 : i32
    %c0_i32_1 = arith.constant 0 : i32
    return %arg0, %c0_i32, %c0_i32_0 : i32, i32, i32
  }
  func.func @transform_2(%arg0: i32) -> (i32, i32, i32) {
    %c0_i32 = arith.constant 0 : i32
    %c0_i32_0 = arith.constant 0 : i32
    %c0_i32_1 = arith.constant 0 : i32
    return %arg0, %c0_i32, %c0_i32_0 : i32, i32, i32
  }
  func.func @transform_3(%arg0: i32) -> (i32, i32) {
    %c0_i32 = arith.constant 0 : i32
    %c0_i32_0 = arith.constant 0 : i32
    %c0_i32_1 = arith.constant 0 : i32
    return %c0_i32, %c0_i32_0 : i32, i32
  }
  func.func @transform_4(%arg0: i32) -> (i32, i32) {
    %c0_i32 = arith.constant 0 : i32
    %c0_i32_0 = arith.constant 0 : i32
    %c0_i32_1 = arith.constant 0 : i32
    return %c0_i32, %c0_i32_0 : i32, i32
  }
  func.func @transform_5(%arg0: i32) -> (i32, i32) {
    %c0_i32 = arith.constant 0 : i32
    %c0_i32_0 = arith.constant 0 : i32
    %c0_i32_1 = arith.constant 0 : i32
    return %c0_i32, %c0_i32_0 : i32, i32
  }
  func.func @transform_6(%arg0: i32) -> (i32, i32) {
    %c0_i32 = arith.constant 0 : i32
    %c0_i32_0 = arith.constant 0 : i32
    %c0_i32_1 = arith.constant 0 : i32
    return %c0_i32, %c0_i32_0 : i32, i32
  }
  func.func @transform_7(%arg0: i32) -> (i32, i32) {
    %c0_i32 = arith.constant 0 : i32
    %c0_i32_0 = arith.constant 0 : i32
    %c0_i32_1 = arith.constant 0 : i32
    return %c0_i32, %c0_i32_0 : i32, i32
  }
  func.func @transform_8(%arg0: i32) -> (i32, i32) {
    %c0_i32 = arith.constant 0 : i32
    %c0_i32_0 = arith.constant 0 : i32
    %c0_i32_1 = arith.constant 0 : i32
    return %c0_i32, %c0_i32_0 : i32, i32
  }
  func.func @transform_9(%arg0: i32) -> (i32, i32) {
    %c0_i32 = arith.constant 0 : i32
    %c0_i32_0 = arith.constant 0 : i32
    %c0_i32_1 = arith.constant 0 : i32
    return %c0_i32, %c0_i32_0 : i32, i32
  }
  func.func @transform_10(%arg0: i32) -> (i32, i32) {
    %c0_i32 = arith.constant 0 : i32
    %c0_i32_0 = arith.constant 0 : i32
    %c0_i32_1 = arith.constant 0 : i32
    return %c0_i32, %c0_i32_0 : i32, i32
  }
  func.func @transform_11(%arg0: i32) -> (i32, i32, i32) {
    %c0_i32 = arith.constant 0 : i32
    %c0_i32_0 = arith.constant 0 : i32
    %c0_i32_1 = arith.constant 0 : i32
    return %arg0, %c0_i32, %c0_i32_0 : i32, i32, i32
  }
  func.func @transform_12(%arg0: i32) -> (i32, i32, i32) {
    %c0_i32 = arith.constant 0 : i32
    %c0_i32_0 = arith.constant 0 : i32
    %c0_i32_1 = arith.constant 0 : i32
    return %arg0, %c0_i32, %c0_i32_0 : i32, i32, i32
  }
  func.func @transform_13(%arg0: i32) -> (i32, i32, i32) {
    %c0_i32 = arith.constant 0 : i32
    %c0_i32_0 = arith.constant 0 : i32
    %c0_i32_1 = arith.constant 0 : i32
    return %arg0, %c0_i32, %c0_i32_0 : i32, i32, i32
  }
  func.func @transform_14(%arg0: i32) -> (i32, i32, i32) {
    %c0_i32 = arith.constant 0 : i32
    %c0_i32_0 = arith.constant 0 : i32
    %c0_i32_1 = arith.constant 0 : i32
    return %arg0, %c0_i32, %c0_i32_0 : i32, i32, i32
  }
  func.func @transform_15(%arg0: i32) -> (i32, i32, i32) {
    %c0_i32 = arith.constant 0 : i32
    %c0_i32_0 = arith.constant 0 : i32
    %c0_i32_1 = arith.constant 0 : i32
    return %arg0, %c0_i32, %c0_i32_0 : i32, i32, i32
  }
  func.func @transform_16(%arg0: i32) -> (i32, i32, i32) {
    %c0_i32 = arith.constant 0 : i32
    %c0_i32_0 = arith.constant 0 : i32
    %c0_i32_1 = arith.constant 0 : i32
    return %arg0, %c0_i32, %c0_i32_0 : i32, i32, i32
  }
}

</mosaic_0001>

<llo_original>
// kernel: tpu_custom_call.1
$region0: #{tpu_custom_call.1}
  #allocation0 [shape = 'u32[]', space=smem, size = 0x4, offset = 0x4, fixed_abs, tag = 'smem constant byte address 0x4 - core index']
  #allocation1 [shape = 'u32[144,128]{1,0:T(1,128)}', space=vmem, size = 0x12000, scoped, tag = 'internal scratch']
  %s0 = inlined_call_operand.hbm [shape: f32[15,2,16,24], index: 0, kind: input, shape index: {}]
  %s1 = inlined_call_operand.hbm [shape: f32[15,16,16], index: 1, kind: input, shape index: {}]
  %s2 = inlined_call_operand.hbm [shape: f32[15,16,16], index: 2, kind: input, shape index: {}]
  %s3 = inlined_call_operand.hbm [shape: f32[1,16], index: 3, kind: input, shape index: {}]
  %s4 = inlined_call_operand.hbm [shape: f32[1,16], index: 4, kind: input, shape index: {}]
  %s5 = inlined_call_operand.vmem [shape: bf16[16,16], index: 5, kind: input, shape index: {}]
  %s6 = inlined_call_operand.hbm [shape: bf16[16,16], index: 6, kind: input, shape index: {}]
  %s7 = inlined_call_operand.hbm [shape: bf16[16,16], index: 7, kind: input, shape index: {}]
  %s8 = inlined_call_operand.hbm [shape: bf16[16,16], index: 8, kind: input, shape index: {}]
  %s9 = inlined_call_operand.vmem [shape: bf16[16,16], index: 9, kind: input, shape index: {}]
  %s10 = inlined_call_operand.hbm [shape: bf16[16,16], index: 10, kind: input, shape index: {}]
  %s11 = inlined_call_operand.hbm [shape: f32[15,16,16], index: 11, kind: output, shape index: {0}]
  %s12 = inlined_call_operand.hbm [shape: f32[15,16,16], index: 12, kind: output, shape index: {1}]
  %s13 = inlined_call_operand.hbm [shape: bf16[15,16,16], index: 13, kind: output, shape index: {2}]
  %s14 = inlined_call_operand.hbm [shape: bf16[15,16,16], index: 14, kind: output, shape index: {3}]
  %s15 = inlined_call_operand.hbm [shape: bf16[15,16,16], index: 15, kind: output, shape index: {4}]
  %s16 = inlined_call_operand.hbm [shape: f32[15,16,16], index: 16, kind: output, shape index: {5}]
  %17 = xla_tuple %s11, %s12, %s13, %s14, %s15, %s16
  %s18 = sld [smem:[#allocation0]]
  $region153: #{tpu_custom_call.1} parent=0
    _
  %s20 = ssub.s32 1, %s18
  %s21 = scalar_select 0, %s20, %s18
  $region1: #{tpu_custom_call.1} parent=0
    #allocation2 [shape = 'u8[32768]{0}', space=vmem, size = 0x8000, scoped, tag = 'input window, operand 0']
    #allocation3 [shape = 's32[2]{0}', space=sflag, size = 0x8, scoped, tag = 'scoped memory for tpu_custom_call.1']
    #allocation4 [shape = 's32[2]{0}', space=sflag, size = 0x8, scoped, tag = 'scoped memory for tpu_custom_call.1']
    #allocation5 [shape = 'u8[16384]{0}', space=vmem, size = 0x4000, scoped, tag = 'input window, operand 1']
    #allocation6 [shape = 's32[2]{0}', space=sflag, size = 0x8, scoped, tag = 'scoped memory for tpu_custom_call.1']
    #allocation7 [shape = 'u8[16384]{0}', space=vmem, size = 0x4000, scoped, tag = 'input window, operand 2']
    #allocation8 [shape = 'u8[512]{0}', space=vmem, size = 0x400, scoped, tag = 'input window, operand 3, single buffered']
    #allocation9 [shape = 's32[1]{0}', space=sflag, size = 0x4, scoped, tag = 'scoped memory for tpu_custom_call.1']
    #allocation10 [shape = 'u8[512]{0}', space=vmem, size = 0x400, scoped, tag = 'input window, operand 4, single buffered']
    #allocation11 [shape = 'u8[4096]{0}', space=vmem, size = 0x1000, scoped, tag = 'input window, operand 6, single buffered']
    #allocation12 [shape = 's32[1]{0}', space=sflag, size = 0x4, scoped, tag = 'scoped memory for tpu_custom_call.1']
    #allocation13 [shape = 'u8[4096]{0}', space=vmem, size = 0x1000, scoped, tag = 'input window, operand 7, single buffered']
    #allocation14 [shape = 'u8[4096]{0}', space=vmem, size = 0x1000, scoped, tag = 'input window, operand 8, single buffered']
    #allocation15 [shape = 's32[1]{0}', space=sflag, size = 0x4, scoped, tag = 'scoped memory for tpu_custom_call.1']
    #allocation16 [shape = 'u8[4096]{0}', space=vmem, size = 0x1000, scoped, tag = 'input window, operand 10, single buffered']
    #allocation17 [shape = 'u8[16384]{0}', space=vmem, size = 0x4000, scoped, tag = 'output window, operand 0']
    #allocation18 [shape = 'u8[16384]{0}', space=vmem, size = 0x4000, scoped, tag = 'output window, operand 1']
    #allocation19 [shape = 's32[2]{0}', space=sflag, size = 0x8, scoped, tag = 'scoped memory for tpu_custom_call.1']
    #allocation20 [shape = 'u8[8192]{0}', space=vmem, size = 0x2000, scoped, tag = 'output window, operand 2']
    #allocation21 [shape = 'u8[8192]{0}', space=vmem, size = 0x2000, scoped, tag = 'output window, operand 3']
    #allocation22 [shape = 's32[2]{0}', space=sflag, size = 0x8, scoped, tag = 'scoped memory for tpu_custom_call.1']
    #allocation23 [shape = 'u8[8192]{0}', space=vmem, size = 0x2000, scoped, tag = 'output window, operand 4']
    #allocation24 [shape = 'u8[16384]{0}', space=vmem, size = 0x4000, scoped, tag = 'output window, operand 5']
    #allocation25 [shape = 's32[2]{0}', space=sflag, size = 0x8, scoped, tag = 'scoped memory for tpu_custom_call.1']
    %22 = vsyncpa [#allocation3], 0
    %s23 = scalar_lea.sflag [#allocation3], 1
    %24 = vsyncpa %s23, 0
    %25 = vsyncpa [#allocation6], 0
    %s26 = scalar_lea.sflag [#allocation6], 1
    %27 = vsyncpa %s26, 0
    %28 = vsyncpa [#allocation9], 0
    %29 = vsyncpa [#allocation12], 0
    %30 = vsyncpa [#allocation15], 0
    %31 = vsyncpa [#allocation4], 0
    %s32 = scalar_lea.sflag [#allocation4], 1
    %33 = vsyncpa %s32, 0
    %34 = vsyncpa [#allocation19], 0
    %s35 = scalar_lea.sflag [#allocation19], 1
    %36 = vsyncpa %s35, 0
    %37 = vsyncpa [#allocation22], 0
    %s38 = scalar_lea.sflag [#allocation22], 1
    %39 = vsyncpa %s38, 0
    %40 = vsyncpa [#allocation25], 0
    %s41 = scalar_lea.sflag [#allocation25], 1
    %42 = vsyncpa %s41, 0
    loop: start=0, step=1, limit=17
    $region2: #{tpu_custom_call.1} parent=1 // loop_pre_header
      _
    $region3: #{tpu_custom_call.1} parent=1 // loop_header
      %s44 = sphi 0, %s48
      %p45 = scmp.ge.s32.totalorder %s44, 17
      %s54 = sphi 0, %s56
      %s57 = sphi 0, %s54
      %s58 = sphi 0, %s57
      %s74 = sphi 0, %s58
      %s80 = sphi 0, %s82
      %s83 = sphi 0, %s80
      %s84 = sphi 0, %s83
      %s100 = sphi 0, %s84
      %s106 = sphi 0, %s108
      %s109 = sphi 0, %s106
      %s110 = sphi 0, %s109
      %s126 = sphi 0, %s110
      %s130 = sphi 0, %s130
      %s132 = sphi 0, %s130
      %s133 = sphi 0, %s132
      %s147 = sphi 0, %s133
      %s151 = sphi 0, %s151
      %s153 = sphi 0, %s151
      %s154 = sphi 0, %s153
      %s168 = sphi 0, %s154
      %s172 = sphi 0, %s172
      %s174 = sphi 0, %s172
      %s175 = sphi 0, %s174
      %s189 = sphi 0, %s175
      %s193 = sphi 0, %s193
      %s195 = sphi 0, %s193
      %s196 = sphi 0, %s195
      %s210 = sphi 0, %s196
      %s214 = sphi 0, %s214
      %s216 = sphi 0, %s214
      %s217 = sphi 0, %s216
      %s231 = sphi 0, %s217
      %s235 = sphi 0, %s235
      %s237 = sphi 0, %s235
      %s238 = sphi 0, %s237
      %s252 = sphi 0, %s238
      %s256 = sphi 0, %s256
      %s258 = sphi 0, %s256
      %s259 = sphi 0, %s258
      %s273 = sphi 0, %s259
      %s277 = sphi 0, %s277
      %s279 = sphi 0, %s277
      %s280 = sphi 0, %s279
      %s294 = sphi 0, %s280
      %s300 = sphi 0, %s302
      %s303 = sphi 0, %s300
      %s304 = sphi 0, %s303
      %s320 = sphi 0, %s304
      %s326 = sphi 0, %s328
      %s329 = sphi 0, %s326
      %s330 = sphi 0, %s329
      %s346 = sphi 0, %s330
      %s352 = sphi 0, %s354
      %s355 = sphi 0, %s352
      %s356 = sphi 0, %s355
      %s372 = sphi 0, %s356
      %s378 = sphi 0, %s380
      %s381 = sphi 0, %s378
      %s382 = sphi 0, %s381
      %s398 = sphi 0, %s382
      %s404 = sphi 0, %s406
      %s407 = sphi 0, %s404
      %s408 = sphi 0, %s407
      %s424 = sphi 0, %s408
      %s430 = sphi 0, %s432
      %s433 = sphi 0, %s430
      %s434 = sphi 0, %s433
      %s450 = sphi 0, %s434
    $region4: #{tpu_custom_call.1} parent=1 // loop_header_branch
      %47 = sbr.rel (%p45) target = $region8
    $region5: #{tpu_custom_call.1} parent=1 // loop_body
      %s49 = ssub.s32 %s44, 1
      %s50 = ssub.s32 %s44, 2
      %s51 = sadd.s32 %s44, 1
      %s52 = ssub.s32 %s44, %s51
      %p53 = scmp.eq.s32.totalorder %s52, 0
      %s55 = sadd.s32 %s54, 1
      %s56 = scalar_select %p53, %s54, %s55
      %p59 = pneg %p53
      %p60 = scmp.eq.s32.totalorder %s44, 14
      %p61 = por %p59, %p60
      %p62 = scmp.ne.s32.totalorder %s54, %s57
      %p63 = scmp.eq.s32.totalorder %s44, 0
      %p64 = por %p62, %p63
      %p65 = scmp.ne.s32.totalorder %s54, %s57
      %p66 = scmp.eq.s32.totalorder %s49, 14
      %p67 = por %p65, %p66
      %p68 = scmp.ne.s32.totalorder %s57, %s58
      %p69 = scmp.eq.s32.totalorder %s49, 0
      %p70 = por %p68, %p69
      %p71 = scmp.ne.s32.totalorder %s57, %s58
      %p72 = scmp.eq.s32.totalorder %s50, 14
      %p73 = por %p71, %p72
      %p75 = scmp.ne.s32.totalorder %s58, %s74
      %p76 = scmp.eq.s32.totalorder %s50, 0
      %p77 = por %p75, %p76
      %s78 = ssub.s32 %s44, %s51
      %p79 = scmp.eq.s32.totalorder %s78, 0
      %s81 = sadd.s32 %s80, 1
      %s82 = scalar_select %p79, %s80, %s81
      %p85 = pneg %p79
      %p86 = scmp.eq.s32.totalorder %s44, 14
      %p87 = por %p85, %p86
      %p88 = scmp.ne.s32.totalorder %s80, %s83
      %p89 = scmp.eq.s32.totalorder %s44, 0
      %p90 = por %p88, %p89
      %p91 = scmp.ne.s32.totalorder %s80, %s83
      %p92 = scmp.eq.s32.totalorder %s49, 14
      %p93 = por %p91, %p92
      %p94 = scmp.ne.s32.totalorder %s83, %s84
      %p95 = scmp.eq.s32.totalorder %s49, 0
      %p96 = por %p94, %p95
      %p97 = scmp.ne.s32.totalorder %s83, %s84
      %p98 = scmp.eq.s32.totalorder %s50, 14
      %p99 = por %p97, %p98
      %p101 = scmp.ne.s32.totalorder %s84, %s100
      %p102 = scmp.eq.s32.totalorder %s50, 0
      %p103 = por %p101, %p102
      %s104 = ssub.s32 %s44, %s51
      %p105 = scmp.eq.s32.totalorder %s104, 0
      %s107 = sadd.s32 %s106, 1
      %s108 = scalar_select %p105, %s106, %s107
      %p111 = pneg %p105
      %p112 = scmp.eq.s32.totalorder %s44, 14
      %p113 = por %p111, %p112
      %p114 = scmp.ne.s32.totalorder %s106, %s109
      %p115 = scmp.eq.s32.totalorder %s44, 0
      %p116 = por %p114, %p115
      %p117 = scmp.ne.s32.totalorder %s106, %s109
      %p118 = scmp.eq.s32.totalorder %s49, 14
      %p119 = por %p117, %p118
      %p120 = scmp.ne.s32.totalorder %s109, %s110
      %p121 = scmp.eq.s32.totalorder %s49, 0
      %p122 = por %p120, %p121
      %p123 = scmp.ne.s32.totalorder %s109, %s110
      %p124 = scmp.eq.s32.totalorder %s50, 14
      %p125 = por %p123, %p124
      %p127 = scmp.ne.s32.totalorder %s110, %s126
      %p128 = scmp.eq.s32.totalorder %s50, 0
      %p129 = por %p127, %p128
      %s131 = sadd.s32 %s130, 1
      %p134 = scmp.eq.s32.totalorder %s44, 14
      %p135 = scmp.ne.s32.totalorder %s130, %s132
      %p136 = scmp.eq.s32.totalorder %s44, 0
      %p137 = por %p135, %p136
      %p138 = scmp.ne.s32.totalorder %s130, %s132
      %p139 = scmp.eq.s32.totalorder %s49, 14
      %p140 = por %p138, %p139
      %p141 = scmp.ne.s32.totalorder %s132, %s133
      %p142 = scmp.eq.s32.totalorder %s49, 0
      %p143 = por %p141, %p142
      %p144 = scmp.ne.s32.totalorder %s132, %s133
      %p145 = scmp.eq.s32.totalorder %s50, 14
      %p146 = por %p144, %p145
      %p148 = scmp.ne.s32.totalorder %s133, %s147
      %p149 = scmp.eq.s32.totalorder %s50, 0
      %p150 = por %p148, %p149
      %s152 = sadd.s32 %s151, 1
      %p155 = scmp.eq.s32.totalorder %s44, 14
      %p156 = scmp.ne.s32.totalorder %s151, %s153
      %p157 = scmp.eq.s32.totalorder %s44, 0
      %p158 = por %p156, %p157
      %p159 = scmp.ne.s32.totalorder %s151, %s153
      %p160 = scmp.eq.s32.totalorder %s49, 14
      %p161 = por %p159, %p160
      %p162 = scmp.ne.s32.totalorder %s153, %s154
      %p163 = scmp.eq.s32.totalorder %s49, 0
      %p164 = por %p162, %p163
      %p165 = scmp.ne.s32.totalorder %s153, %s154
      %p166 = scmp.eq.s32.totalorder %s50, 14
      %p167 = por %p165, %p166
      %p169 = scmp.ne.s32.totalorder %s154, %s168
      %p170 = scmp.eq.s32.totalorder %s50, 0
      %p171 = por %p169, %p170
      %s173 = sadd.s32 %s172, 1
      %p176 = scmp.eq.s32.totalorder %s44, 14
      %p177 = scmp.ne.s32.totalorder %s172, %s174
      %p178 = scmp.eq.s32.totalorder %s44, 0
      %p179 = por %p177, %p178
      %p180 = scmp.ne.s32.totalorder %s172, %s174
      %p181 = scmp.eq.s32.totalorder %s49, 14
      %p182 = por %p180, %p181
      %p183 = scmp.ne.s32.totalorder %s174, %s175
      %p184 = scmp.eq.s32.totalorder %s49, 0
      %p185 = por %p183, %p184
      %p186 = scmp.ne.s32.totalorder %s174, %s175
      %p187 = scmp.eq.s32.totalorder %s50, 14
      %p188 = por %p186, %p187
      %p190 = scmp.ne.s32.totalorder %s175, %s189
      %p191 = scmp.eq.s32.totalorder %s50, 0
      %p192 = por %p190, %p191
      %s194 = sadd.s32 %s193, 1
      %p197 = scmp.eq.s32.totalorder %s44, 14
      %p198 = scmp.ne.s32.totalorder %s193, %s195
      %p199 = scmp.eq.s32.totalorder %s44, 0
      %p200 = por %p198, %p199
      %p201 = scmp.ne.s32.totalorder %s193, %s195
      %p202 = scmp.eq.s32.totalorder %s49, 14
      %p203 = por %p201, %p202
      %p204 = scmp.ne.s32.totalorder %s195, %s196
      %p205 = scmp.eq.s32.totalorder %s49, 0
      %p206 = por %p204, %p205
      %p207 = scmp.ne.s32.totalorder %s195, %s196
      %p208 = scmp.eq.s32.totalorder %s50, 14
      %p209 = por %p207, %p208
      %p211 = scmp.ne.s32.totalorder %s196, %s210
      %p212 = scmp.eq.s32.totalorder %s50, 0
      %p213 = por %p211, %p212
      %s215 = sadd.s32 %s214, 1
      %p218 = scmp.eq.s32.totalorder %s44, 14
      %p219 = scmp.ne.s32.totalorder %s214, %s216
      %p220 = scmp.eq.s32.totalorder %s44, 0
      %p221 = por %p219, %p220
      %p222 = scmp.ne.s32.totalorder %s214, %s216
      %p223 = scmp.eq.s32.totalorder %s49, 14
      %p224 = por %p222, %p223
      %p225 = scmp.ne.s32.totalorder %s216, %s217
      %p226 = scmp.eq.s32.totalorder %s49, 0
      %p227 = por %p225, %p226
      %p228 = scmp.ne.s32.totalorder %s216, %s217
      %p229 = scmp.eq.s32.totalorder %s50, 14
      %p230 = por %p228, %p229
      %p232 = scmp.ne.s32.totalorder %s217, %s231
      %p233 = scmp.eq.s32.totalorder %s50, 0
      %p234 = por %p232, %p233
      %s236 = sadd.s32 %s235, 1
      %p239 = scmp.eq.s32.totalorder %s44, 14
      %p240 = scmp.ne.s32.totalorder %s235, %s237
      %p241 = scmp.eq.s32.totalorder %s44, 0
      %p242 = por %p240, %p241
      %p243 = scmp.ne.s32.totalorder %s235, %s237
      %p244 = scmp.eq.s32.totalorder %s49, 14
      %p245 = por %p243, %p244
      %p246 = scmp.ne.s32.totalorder %s237, %s238
      %p247 = scmp.eq.s32.totalorder %s49, 0
      %p248 = por %p246, %p247
      %p249 = scmp.ne.s32.totalorder %s237, %s238
      %p250 = scmp.eq.s32.totalorder %s50, 14
      %p251 = por %p249, %p250
      %p253 = scmp.ne.s32.totalorder %s238, %s252
      %p254 = scmp.eq.s32.totalorder %s50, 0
      %p255 = por %p253, %p254
      %s257 = sadd.s32 %s256, 1
      %p260 = scmp.eq.s32.totalorder %s44, 14
      %p261 = scmp.ne.s32.totalorder %s256, %s258
      %p262 = scmp.eq.s32.totalorder %s44, 0
      %p263 = por %p261, %p262
      %p264 = scmp.ne.s32.totalorder %s256, %s258
      %p265 = scmp.eq.s32.totalorder %s49, 14
      %p266 = por %p264, %p265
      %p267 = scmp.ne.s32.totalorder %s258, %s259
      %p268 = scmp.eq.s32.totalorder %s49, 0
      %p269 = por %p267, %p268
      %p270 = scmp.ne.s32.totalorder %s258, %s259
      %p271 = scmp.eq.s32.totalorder %s50, 14
      %p272 = por %p270, %p271
      %p274 = scmp.ne.s32.totalorder %s259, %s273
      %p275 = scmp.eq.s32.totalorder %s50, 0
      %p276 = por %p274, %p275
      %s278 = sadd.s32 %s277, 1
      %p281 = scmp.eq.s32.totalorder %s44, 14
      %p282 = scmp.ne.s32.totalorder %s277, %s279
      %p283 = scmp.eq.s32.totalorder %s44, 0
      %p284 = por %p282, %p283
      %p285 = scmp.ne.s32.totalorder %s277, %s279
      %p286 = scmp.eq.s32.totalorder %s49, 14
      %p287 = por %p285, %p286
      %p288 = scmp.ne.s32.totalorder %s279, %s280
      %p289 = scmp.eq.s32.totalorder %s49, 0
      %p290 = por %p288, %p289
      %p291 = scmp.ne.s32.totalorder %s279, %s280
      %p292 = scmp.eq.s32.totalorder %s50, 14
      %p293 = por %p291, %p292
      %p295 = scmp.ne.s32.totalorder %s280, %s294
      %p296 = scmp.eq.s32.totalorder %s50, 0
      %p297 = por %p295, %p296
      %s298 = ssub.s32 %s44, %s51
      %p299 = scmp.eq.s32.totalorder %s298, 0
      %s301 = sadd.s32 %s300, 1
      %s302 = scalar_select %p299, %s300, %s301
      %p305 = pneg %p299
      %p306 = scmp.eq.s32.totalorder %s44, 14
      %p307 = por %p305, %p306
      %p308 = scmp.ne.s32.totalorder %s300, %s303
      %p309 = scmp.eq.s32.totalorder %s44, 0
      %p310 = por %p308, %p309
      %p311 = scmp.ne.s32.totalorder %s300, %s303
      %p312 = scmp.eq.s32.totalorder %s49, 14
      %p313 = por %p311, %p312
      %p314 = scmp.ne.s32.totalorder %s303, %s304
      %p315 = scmp.eq.s32.totalorder %s49, 0
      %p316 = por %p314, %p315
      %p317 = scmp.ne.s32.totalorder %s303, %s304
      %p318 = scmp.eq.s32.totalorder %s50, 14
      %p319 = por %p317, %p318
      %p321 = scmp.ne.s32.totalorder %s304, %s320
      %p322 = scmp.eq.s32.totalorder %s50, 0
      %p323 = por %p321, %p322
      %s324 = ssub.s32 %s44, %s51
      %p325 = scmp.eq.s32.totalorder %s324, 0
      %s327 = sadd.s32 %s326, 1
      %s328 = scalar_select %p325, %s326, %s327
      %p331 = pneg %p325
      %p332 = scmp.eq.s32.totalorder %s44, 14
      %p333 = por %p331, %p332
      %p334 = scmp.ne.s32.totalorder %s326, %s329
      %p335 = scmp.eq.s32.totalorder %s44, 0
      %p336 = por %p334, %p335
      %p337 = scmp.ne.s32.totalorder %s326, %s329
      %p338 = scmp.eq.s32.totalorder %s49, 14
      %p339 = por %p337, %p338
      %p340 = scmp.ne.s32.totalorder %s329, %s330
      %p341 = scmp.eq.s32.totalorder %s49, 0
      %p342 = por %p340, %p341
      %p343 = scmp.ne.s32.totalorder %s329, %s330
      %p344 = scmp.eq.s32.totalorder %s50, 14
      %p345 = por %p343, %p344
      %p347 = scmp.ne.s32.totalorder %s330, %s346
      %p348 = scmp.eq.s32.totalorder %s50, 0
      %p349 = por %p347, %p348
      %s350 = ssub.s32 %s44, %s51
      %p351 = scmp.eq.s32.totalorder %s350, 0
      %s353 = sadd.s32 %s352, 1
      %s354 = scalar_select %p351, %s352, %s353
      %p357 = pneg %p351
      %p358 = scmp.eq.s32.totalorder %s44, 14
      %p359 = por %p357, %p358
      %p360 = scmp.ne.s32.totalorder %s352, %s355
      %p361 = scmp.eq.s32.totalorder %s44, 0
      %p362 = por %p360, %p361
      %p363 = scmp.ne.s32.totalorder %s352, %s355
      %p364 = scmp.eq.s32.totalorder %s49, 14
      %p365 = por %p363, %p364
      %p366 = scmp.ne.s32.totalorder %s355, %s356
      %p367 = scmp.eq.s32.totalorder %s49, 0
      %p368 = por %p366, %p367
      %p369 = scmp.ne.s32.totalorder %s355, %s356
      %p370 = scmp.eq.s32.totalorder %s50, 14
      %p371 = por %p369, %p370
      %p373 = scmp.ne.s32.totalorder %s356, %s372
      %p374 = scmp.eq.s32.totalorder %s50, 0
      %p375 = por %p373, %p374
      %s376 = ssub.s32 %s44, %s51
      %p377 = scmp.eq.s32.totalorder %s376, 0
      %s379 = sadd.s32 %s378, 1
      %s380 = scalar_select %p377, %s378, %s379
      %p383 = pneg %p377
      %p384 = scmp.eq.s32.totalorder %s44, 14
      %p385 = por %p383, %p384
      %p386 = scmp.ne.s32.totalorder %s378, %s381
      %p387 = scmp.eq.s32.totalorder %s44, 0
      %p388 = por %p386, %p387
      %p389 = scmp.ne.s32.totalorder %s378, %s381
      %p390 = scmp.eq.s32.totalorder %s49, 14
      %p391 = por %p389, %p390
      %p392 = scmp.ne.s32.totalorder %s381, %s382
      %p393 = scmp.eq.s32.totalorder %s49, 0
      %p394 = por %p392, %p393
      %p395 = scmp.ne.s32.totalorder %s381, %s382
      %p396 = scmp.eq.s32.totalorder %s50, 14
      %p397 = por %p395, %p396
      %p399 = scmp.ne.s32.totalorder %s382, %s398
      %p400 = scmp.eq.s32.totalorder %s50, 0
      %p401 = por %p399, %p400
      %s402 = ssub.s32 %s44, %s51
      %p403 = scmp.eq.s32.totalorder %s402, 0
      %s405 = sadd.s32 %s404, 1
      %s406 = scalar_select %p403, %s404, %s405
      %p409 = pneg %p403
      %p410 = scmp.eq.s32.totalorder %s44, 14
      %p411 = por %p409, %p410
      %p412 = scmp.ne.s32.totalorder %s404, %s407
      %p413 = scmp.eq.s32.totalorder %s44, 0
      %p414 = por %p412, %p413
      %p415 = scmp.ne.s32.totalorder %s404, %s407
      %p416 = scmp.eq.s32.totalorder %s49, 14
      %p417 = por %p415, %p416
      %p418 = scmp.ne.s32.totalorder %s407, %s408
      %p419 = scmp.eq.s32.totalorder %s49, 0
      %p420 = por %p418, %p419
      %p421 = scmp.ne.s32.totalorder %s407, %s408
      %p422 = scmp.eq.s32.totalorder %s50, 14
      %p423 = por %p421, %p422
      %p425 = scmp.ne.s32.totalorder %s408, %s424
      %p426 = scmp.eq.s32.totalorder %s50, 0
      %p427 = por %p425, %p426
      %s428 = ssub.s32 %s44, %s51
      %p429 = scmp.eq.s32.totalorder %s428, 0
      %s431 = sadd.s32 %s430, 1
      %s432 = scalar_select %p429, %s430, %s431
      %p435 = pneg %p429
      %p436 = scmp.eq.s32.totalorder %s44, 14
      %p437 = por %p435, %p436
      %p438 = scmp.ne.s32.totalorder %s430, %s433
      %p439 = scmp.eq.s32.totalorder %s44, 0
      %p440 = por %p438, %p439
      %p441 = scmp.ne.s32.totalorder %s430, %s433
      %p442 = scmp.eq.s32.totalorder %s49, 14
      %p443 = por %p441, %p442
      %p444 = scmp.ne.s32.totalorder %s433, %s434
      %p445 = scmp.eq.s32.totalorder %s49, 0
      %p446 = por %p444, %p445
      %p447 = scmp.ne.s32.totalorder %s433, %s434
      %p448 = scmp.eq.s32.totalorder %s50, 14
      %p449 = por %p447, %p448
      %p451 = scmp.ne.s32.totalorder %s434, %s450
      %p452 = scmp.eq.s32.totalorder %s50, 0
      %p453 = por %p451, %p452
      %p454 = scmp.le.s32.totalorder 1, %s44
      %p455 = scmp.lt.s32.totalorder %s44, 16
      %p456 = pnand %p454, %p455
      %p457 = pneg %p456
      // Predicated region
      $region9: #{tpu_custom_call.1} parent=5 // pred_check
        _
      $region10: #{tpu_custom_call.1} parent=5 // pred_check_branch
        %459 = sbr.rel (%p456) target = $region12
      $region11: #{tpu_custom_call.1} parent=5 // pred_region
        %s460 = ssub.s32 %s44, 1
        // Predicated region
        $region13: #{tpu_custom_call.1} parent=11 // pred_check
          %p461 = pneg %p143
        $region14: #{tpu_custom_call.1} parent=11 // pred_check_branch
          %463 = sbr.rel (%p461) target = $region16
        $region15: #{tpu_custom_call.1} parent=11 // pred_region
          %s465 = ssub.s32 16, 16
          %466 = vsyncadd [#allocation9], %s465
          %s468 = sshll.u32 [#allocation8], 4
          %s469 = int_to_ptr.vmem [resolvable:$true] %s468
          %471 = dma.hbm_to_vmem [thread:$0]  %s3, 16, %s469, [#allocation9]
        $region16: #{tpu_custom_call.1} parent=11 // pred_fallthru
          _
        // Predicated region
        $region17: #{tpu_custom_call.1} parent=11 // pred_check
          %p472 = pneg %p164
        $region18: #{tpu_custom_call.1} parent=11 // pred_check_branch
          %474 = sbr.rel (%p472) target = $region20
        $region19: #{tpu_custom_call.1} parent=11 // pred_region
          %s476 = ssub.s32 16, 16
          %477 = vsyncadd [#allocation9], %s476
          %s479 = sshll.u32 [#allocation10], 4
          %s480 = int_to_ptr.vmem [resolvable:$true] %s479
          %482 = dma.hbm_to_vmem [thread:$0]  %s4, 16, %s480, [#allocation9]
        $region20: #{tpu_custom_call.1} parent=11 // pred_fallthru
          _
        // Predicated region
        $region21: #{tpu_custom_call.1} parent=11 // pred_check
          %p483 = pneg %p185
        $region22: #{tpu_custom_call.1} parent=11 // pred_check_branch
          %485 = sbr.rel (%p483) target = $region24
        $region23: #{tpu_custom_call.1} parent=11 // pred_region
          _
        $region24: #{tpu_custom_call.1} parent=11 // pred_fallthru
          _
        // Predicated region
        $region25: #{tpu_custom_call.1} parent=11 // pred_check
          %p486 = pneg %p206
        $region26: #{tpu_custom_call.1} parent=11 // pred_check_branch
          %488 = sbr.rel (%p486) target = $region28
        $region27: #{tpu_custom_call.1} parent=11 // pred_region
          %s490 = ssub.s32 128, 128
          %491 = vsyncadd [#allocation12], %s490
          %s492 = sshll.u32 [#allocation11], 4
          %s493 = int_to_ptr.vmem [resolvable:$true] %s492
          %498 = dma.hbm_to_vmem [thread:$0]  %s6, 128, %s493, [#allocation12], 64, 64, 4
        $region28: #{tpu_custom_call.1} parent=11 // pred_fallthru
          _
        // Predicated region
        $region29: #{tpu_custom_call.1} parent=11 // pred_check
          %p499 = pneg %p227
        $region30: #{tpu_custom_call.1} parent=11 // pred_check_branch
          %501 = sbr.rel (%p499) target = $region32
        $region31: #{tpu_custom_call.1} parent=11 // pred_region
          %s503 = ssub.s32 128, 128
          %504 = vsyncadd [#allocation12], %s503
          %s505 = sshll.u32 [#allocation13], 4
          %s506 = int_to_ptr.vmem [resolvable:$true] %s505
          %511 = dma.hbm_to_vmem [thread:$0]  %s7, 128, %s506, [#allocation12], 64, 64, 4
        $region32: #{tpu_custom_call.1} parent=11 // pred_fallthru
          _
        // Predicated region
        $region33: #{tpu_custom_call.1} parent=11 // pred_check
          %p512 = pneg %p248
        $region34: #{tpu_custom_call.1} parent=11 // pred_check_branch
          %514 = sbr.rel (%p512) target = $region36
        $region35: #{tpu_custom_call.1} parent=11 // pred_region
          %s516 = ssub.s32 128, 128
          %517 = vsyncadd [#allocation15], %s516
          %s518 = sshll.u32 [#allocation14], 4
          %s519 = int_to_ptr.vmem [resolvable:$true] %s518
          %524 = dma.hbm_to_vmem [thread:$0]  %s8, 128, %s519, [#allocation15], 64, 64, 4
        $region36: #{tpu_custom_call.1} parent=11 // pred_fallthru
          _
        // Predicated region
        $region37: #{tpu_custom_call.1} parent=11 // pred_check
          %p525 = pneg %p269
        $region38: #{tpu_custom_call.1} parent=11 // pred_check_branch
          %527 = sbr.rel (%p525) target = $region40
        $region39: #{tpu_custom_call.1} parent=11 // pred_region
          _
        $region40: #{tpu_custom_call.1} parent=11 // pred_fallthru
          _
        // Predicated region
        $region41: #{tpu_custom_call.1} parent=11 // pred_check
          %p528 = pneg %p290
        $region42: #{tpu_custom_call.1} parent=11 // pred_check_branch
          %530 = sbr.rel (%p528) target = $region44
        $region43: #{tpu_custom_call.1} parent=11 // pred_region
          %s532 = ssub.s32 128, 128
          %533 = vsyncadd [#allocation15], %s532
          %s534 = sshll.u32 [#allocation16], 4
          %s535 = int_to_ptr.vmem [resolvable:$true] %s534
          %540 = dma.hbm_to_vmem [thread:$0]  %s10, 128, %s535, [#allocation15], 64, 64, 4
        $region44: #{tpu_custom_call.1} parent=11 // pred_fallthru
          _
      $region12: #{tpu_custom_call.1} parent=5 // pred_fallthru
        _
      %p541 = scmp.lt.s32.totalorder %s44, 15
      // Predicated region
      $region45: #{tpu_custom_call.1} parent=5 // pred_check
        %p542 = pneg %p541
      $region46: #{tpu_custom_call.1} parent=5 // pred_check_branch
        %544 = sbr.rel (%p542) target = $region48
      $region47: #{tpu_custom_call.1} parent=5 // pred_region
        // Predicated region
        $region49: #{tpu_custom_call.1} parent=47 // pred_check
          %p545 = pneg %p64
        $region50: #{tpu_custom_call.1} parent=47 // pred_check_branch
          %547 = sbr.rel (%p545) target = $region52
        $region51: #{tpu_custom_call.1} parent=47 // pred_region
          %s548 = sand.u32 %s54, 1
          %s549 = scalar_lea.sflag [#allocation3], %s548
          %s550 = sand.u32 %s54, 1
          %s551 = smul.addr %s550, 32
          %s552 = scalar_lea.vmem [#allocation2], %s551
          %s554 = ssub.s32 512, 512
          %555 = vsyncadd %s549, %s554
          %s556 = smul.addr %s44, 4
          %s557 = smul.addr %s556, 128
          %s558 = scalar_lea.hbm %s0, %s557
          %s559 = sshll.u32 %s552, 4
          %s560 = int_to_ptr.vmem [resolvable:$true] %s559
          %565 = dma.hbm_to_vmem [thread:$0]  %s558, 512, %s560, %s549, 128, 128, 8
        $region52: #{tpu_custom_call.1} parent=47 // pred_fallthru
          _
        // Predicated region
        $region53: #{tpu_custom_call.1} parent=47 // pred_check
          %p566 = pneg %p90
        $region54: #{tpu_custom_call.1} parent=47 // pred_check_branch
          %568 = sbr.rel (%p566) target = $region56
        $region55: #{tpu_custom_call.1} parent=47 // pred_region
          %s569 = sand.u32 %s44, 1
          %s570 = scalar_lea.sflag [#allocation6], %s569
          %s571 = sand.u32 %s80, 1
          %s572 = smul.addr %s571, 16
          %s573 = scalar_lea.vmem [#allocation5], %s572
          %s575 = ssub.s32 256, 256
          %576 = vsyncadd %s570, %s575
          %s577 = smul.addr %s44, 2
          %s578 = smul.addr %s577, 128
          %s579 = scalar_lea.hbm %s1, %s578
          %s580 = sshll.u32 %s573, 4
          %s581 = int_to_ptr.vmem [resolvable:$true] %s580
          %586 = dma.hbm_to_vmem [thread:$0]  %s579, 256, %s581, %s570, 128, 128, 8
        $region56: #{tpu_custom_call.1} parent=47 // pred_fallthru
          _
        // Predicated region
        $region57: #{tpu_custom_call.1} parent=47 // pred_check
          %p587 = pneg %p116
        $region58: #{tpu_custom_call.1} parent=47 // pred_check_branch
          %589 = sbr.rel (%p587) target = $region60
        $region59: #{tpu_custom_call.1} parent=47 // pred_region
          %s590 = sand.u32 %s44, 1
          %s591 = scalar_lea.sflag [#allocation6], %s590
          %s592 = sand.u32 %s106, 1
          %s593 = smul.addr %s592, 16
          %s594 = scalar_lea.vmem [#allocation7], %s593
          %s596 = ssub.s32 256, 256
          %597 = vsyncadd %s591, %s596
          %s598 = smul.addr %s44, 2
          %s599 = smul.addr %s598, 128
          %s600 = scalar_lea.hbm %s2, %s599
          %s601 = sshll.u32 %s594, 4
          %s602 = int_to_ptr.vmem [resolvable:$true] %s601
          %607 = dma.hbm_to_vmem [thread:$0]  %s600, 256, %s602, %s591, 128, 128, 8
        $region60: #{tpu_custom_call.1} parent=47 // pred_fallthru
          _
      $region48: #{tpu_custom_call.1} parent=5 // pred_fallthru
        _
      %p608 = scmp.le.s32.totalorder 1, %s44
      %p609 = scmp.lt.s32.totalorder %s44, 16
      %p610 = pnand %p608, %p609
      %p611 = pneg %p610
      // Predicated region
      $region61: #{tpu_custom_call.1} parent=5 // pred_check
        _
      $region62: #{tpu_custom_call.1} parent=5 // pred_check_branch
        %613 = sbr.rel (%p610) target = $region64
      $region63: #{tpu_custom_call.1} parent=5 // pred_region
        %s614 = ssub.s32 %s44, 1
        %s615 = sand.u32 %s57, 1
        %s616 = scalar_lea.sflag [#allocation3], %s615
        %s617 = sand.u32 %s57, 1
        %s618 = smul.addr %s617, 32
        %s619 = scalar_lea.vmem [#allocation2], %s618
        // Predicated region
        $region65: #{tpu_custom_call.1} parent=63 // pred_check
          %p620 = pneg %p70
        $region66: #{tpu_custom_call.1} parent=63 // pred_check_branch
          %622 = sbr.rel (%p620) target = $region68
        $region67: #{tpu_custom_call.1} parent=63 // pred_region
          %623 = dma.done %s616, 512
        $region68: #{tpu_custom_call.1} parent=63 // pred_fallthru
          _
        %s624 = sand.u32 %s49, 1
        %s625 = scalar_lea.sflag [#allocation6], %s624
        %s626 = sand.u32 %s83, 1
        %s627 = smul.addr %s626, 16
        %s628 = scalar_lea.vmem [#allocation5], %s627
        // Predicated region
        $region69: #{tpu_custom_call.1} parent=63 // pred_check
          %p629 = pneg %p96
        $region70: #{tpu_custom_call.1} parent=63 // pred_check_branch
          %631 = sbr.rel (%p629) target = $region72
        $region71: #{tpu_custom_call.1} parent=63 // pred_region
          %632 = dma.done %s625, 256
        $region72: #{tpu_custom_call.1} parent=63 // pred_fallthru
          _
        %s633 = sand.u32 %s49, 1
        %s634 = scalar_lea.sflag [#allocation6], %s633
        %s635 = sand.u32 %s109, 1
        %s636 = smul.addr %s635, 16
        %s637 = scalar_lea.vmem [#allocation7], %s636
        // Predicated region
        $region73: #{tpu_custom_call.1} parent=63 // pred_check
          %p638 = pneg %p122
        $region74: #{tpu_custom_call.1} parent=63 // pred_check_branch
          %640 = sbr.rel (%p638) target = $region76
        $region75: #{tpu_custom_call.1} parent=63 // pred_region
          %641 = dma.done %s634, 256
        $region76: #{tpu_custom_call.1} parent=63 // pred_fallthru
          _
        // Predicated region
        $region77: #{tpu_custom_call.1} parent=63 // pred_check
          %p642 = pneg %p143
        $region78: #{tpu_custom_call.1} parent=63 // pred_check_branch
          %644 = sbr.rel (%p642) target = $region80
        $region79: #{tpu_custom_call.1} parent=63 // pred_region
          %645 = dma.done [#allocation9], 16
        $region80: #{tpu_custom_call.1} parent=63 // pred_fallthru
          _
        // Predicated region
        $region81: #{tpu_custom_call.1} parent=63 // pred_check
          %p646 = pneg %p164
        $region82: #{tpu_custom_call.1} parent=63 // pred_check_branch
          %648 = sbr.rel (%p646) target = $region84
        $region83: #{tpu_custom_call.1} parent=63 // pred_region
          %649 = dma.done [#allocation9], 16
        $region84: #{tpu_custom_call.1} parent=63 // pred_fallthru
          _
        // Predicated region
        $region85: #{tpu_custom_call.1} parent=63 // pred_check
          %p650 = pneg %p206
        $region86: #{tpu_custom_call.1} parent=63 // pred_check_branch
          %652 = sbr.rel (%p650) target = $region88
        $region87: #{tpu_custom_call.1} parent=63 // pred_region
          %653 = dma.done [#allocation12], 128
        $region88: #{tpu_custom_call.1} parent=63 // pred_fallthru
          _
        // Predicated region
        $region89: #{tpu_custom_call.1} parent=63 // pred_check
          %p654 = pneg %p227
        $region90: #{tpu_custom_call.1} parent=63 // pred_check_branch
          %656 = sbr.rel (%p654) target = $region92
        $region91: #{tpu_custom_call.1} parent=63 // pred_region
          %657 = dma.done [#allocation12], 128
        $region92: #{tpu_custom_call.1} parent=63 // pred_fallthru
          _
        // Predicated region
        $region93: #{tpu_custom_call.1} parent=63 // pred_check
          %p658 = pneg %p248
        $region94: #{tpu_custom_call.1} parent=63 // pred_check_branch
          %660 = sbr.rel (%p658) target = $region96
        $region95: #{tpu_custom_call.1} parent=63 // pred_region
          %661 = dma.done [#allocation15], 128
        $region96: #{tpu_custom_call.1} parent=63 // pred_fallthru
          _
        // Predicated region
        $region97: #{tpu_custom_call.1} parent=63 // pred_check
          %p662 = pneg %p290
        $region98: #{tpu_custom_call.1} parent=63 // pred_check_branch
          %664 = sbr.rel (%p662) target = $region100
        $region99: #{tpu_custom_call.1} parent=63 // pred_region
          %665 = dma.done [#allocation15], 128
        $region100: #{tpu_custom_call.1} parent=63 // pred_fallthru
          _
        %s666 = sand.u32 %s57, 1
        %s667 = scalar_lea.sflag [#allocation3], %s666
        %s668 = sand.u32 %s57, 1
        %s669 = smul.addr %s668, 32
        %s670 = scalar_lea.vmem [#allocation2], %s669
        %p671 = pneg %p70
        %p672 = pneg %p67
        %s673 = sand.u32 %s49, 1
        %s674 = scalar_lea.sflag [#allocation6], %s673
        %s675 = sand.u32 %s83, 1
        %s676 = smul.addr %s675, 16
        %s677 = scalar_lea.vmem [#allocation5], %s676
        %p678 = pneg %p96
        %p679 = pneg %p93
        %s680 = sand.u32 %s49, 1
        %s681 = scalar_lea.sflag [#allocation6], %s680
        %s682 = sand.u32 %s109, 1
        %s683 = smul.addr %s682, 16
        %s684 = scalar_lea.vmem [#allocation7], %s683
        %p685 = pneg %p122
        %p686 = pneg %p119
        %p687 = pneg %p143
        %p688 = pneg %p140
        %p689 = pneg %p164
        %p690 = pneg %p161
        %p691 = pneg %p185
        %p692 = pneg %p182
        %p693 = pneg %p206
        %p694 = pneg %p203
        %p695 = pneg %p227
        %p696 = pneg %p224
        %p697 = pneg %p248
        %p698 = pneg %p245
        %p699 = pneg %p269
        %p700 = pneg %p266
        %p701 = pneg %p290
        %p702 = pneg %p287
        %p703 = pneg %p316
        %p704 = pneg %p313
        %s705 = sand.u32 %s303, 1
        %s706 = scalar_lea.sflag [#allocation4], %s705
        %s707 = sand.u32 %s303, 1
        %s708 = smul.addr %s707, 16
        %s709 = scalar_lea.vmem [#allocation17], %s708
        %p710 = pneg %p342
        %p711 = pneg %p339
        %s712 = sand.u32 %s49, 1
        %s713 = scalar_lea.sflag [#allocation19], %s712
        %s714 = sand.u32 %s329, 1
        %s715 = smul.addr %s714, 16
        %s716 = scalar_lea.vmem [#allocation18], %s715
        %p717 = pneg %p368
        %p718 = pneg %p365
        %s719 = sand.u32 %s49, 1
        %s720 = scalar_lea.sflag [#allocation19], %s719
        %s721 = sand.u32 %s355, 1
        %s722 = smul.addr %s721, 8
        %s723 = scalar_lea.vmem [#allocation20], %s722
        %p724 = pneg %p394
        %p725 = pneg %p391
        %s726 = sand.u32 %s49, 1
        %s727 = scalar_lea.sflag [#allocation22], %s726
        %s728 = sand.u32 %s381, 1
        %s729 = smul.addr %s728, 8
        %s730 = scalar_lea.vmem [#allocation21], %s729
        %p731 = pneg %p420
        %p732 = pneg %p417
        %s733 = sand.u32 %s49, 1
        %s734 = scalar_lea.sflag [#allocation22], %s733
        %s735 = sand.u32 %s407, 1
        %s736 = smul.addr %s735, 8
        %s737 = scalar_lea.vmem [#allocation23], %s736
        %p738 = pneg %p446
        %p739 = pneg %p443
        %s740 = sand.u32 %s433, 1
        %s741 = scalar_lea.sflag [#allocation25], %s740
        %s742 = sand.u32 %s433, 1
        %s743 = smul.addr %s742, 16
        %s744 = scalar_lea.vmem [#allocation24], %s743
        %v746 = vld [vmem:[#allocation8] sm:$0x1]
        %v747 = vld [vmem:[#allocation10] sm:$0x1]
        %v748 = vld [vmem:[%s619] sm:$0xff]
        %v749 = vld [vmem:[%s619 + $0x8] sm:$0xff]
        %s750 = scalar_lea.vmem %s619, 16 [#allocation2]
        %v751 = vld [vmem:[%s750] sm:$0xff]
        %v752 = vld [vmem:[%s750 + $0x8] sm:$0xff]
        %v754 = vlaneseq
        %v755 = vshrl.u32 %v754, 7
        %v756 = vsub.s32 0, %v755
        %v757 = vrot.slane %v746, %v756
        %758 = vrot.lane.b32.xlu0 %v757, 4
        %v759 = vpop.permute.xlu0 %758
        %v761 = vmul.f32 %v748, %v759
        %v762 = vmul.f32 %v749, %v759
        %v763 = vld [vmem:[%s628] sm:$0xff]
        %v764 = vld [vmem:[%s628 + $0x8] sm:$0xff]
        %v766 = vlaneseq
        %v767 = vshrl.u32 %v766, 7
        %v768 = vsub.s32 0, %v767
        %v769 = vrot.slane %v747, %v768
        %v771 = vmul.f32 %v763, %v769
        %v772 = vmul.f32 %v764, %v769
        %775 = vrot.lane.b32.xlu0 %v771, 4
        %v776 = vpop.permute.xlu0 %775
        %777 = vrot.lane.b32.xlu0 %v772, 4
        %v778 = vpop.permute.xlu0 %777
        %v781 = vadd.f32 %v761, %v776
        %v782 = vadd.f32 %v762, %v778
        %v783 = vmul.f32 %v751, %v759
        %v784 = vmul.f32 %v752, %v759
        %v785 = vld [vmem:[%s637] sm:$0xff]
        %v786 = vld [vmem:[%s637 + $0x8] sm:$0xff]
        %v787 = vmul.f32 %v785, %v769
        %v788 = vmul.f32 %v786, %v769
        %791 = vrot.lane.b32.xlu0 %v787, 4
        %v792 = vpop.permute.xlu0 %791
        %793 = vrot.lane.b32.xlu0 %v788, 4
        %v794 = vpop.permute.xlu0 %793
        %v797 = vadd.f32 %v783, %v792
        %v798 = vadd.f32 %v784, %v794
        %801 = vrot.lane.b32.xlu0 %v781, 124
        %v802 = vpop.permute.xlu0 %801
        %803 = vrot.lane.b32.xlu0 %v782, 124
        %v804 = vpop.permute.xlu0 %803
        %vm807 = vcmask 130048
        %808 = vst.msk [vmem:[%s709] sm:$0xff] %vm807, %v802
        %809 = vst.msk [vmem:[%s709 + $0x8] sm:$0xff] %vm807, %v804
        %812 = vrot.lane.b32.xlu0 %v797, 124
        %v813 = vpop.permute.xlu0 %812
        %814 = vrot.lane.b32.xlu0 %v798, 124
        %v815 = vpop.permute.xlu0 %814
        %818 = vst.msk [vmem:[%s716] sm:$0xff] %vm807, %v813
        %819 = vst.msk [vmem:[%s716 + $0x8] sm:$0xff] %vm807, %v815
        %v820 = vpack.c.bf16 %v782, %v781
        %v821 = vpack.c.bf16 %v798, %v797
        %v822 = vadd.f32 %v781, %v797
        %v823 = vadd.f32 %v782, %v798
        %v824 = vpack.c.bf16 %v823, %v822
        %v825 = vld [vmem:[%s5] sm:$0xf]
        %v826 = vld [vmem:[%s5 + $0x4] sm:$0xf]
        %v829 = vunpack.c.l.b16 %v825
        %v830 = vunpack.c.l.b16 %v826
        %v831 = vpack.c.b16 %v830, %v829
        %833 = vrot.lane.b32.xlu0 %v820, 124
        %v834 = vpop.permute.xlu0 %833
        %v837 = vsel %vm807, %v831, 0
        %839 = vmatprep.subr.bf16.mxu0 0
        %840 = vmatpush1.bf16.msra.mxu0 0
        %841 = vmatprep.subr.bf16.mxu0 0
        %842 = vmatpush1.bf16.msra.mxu0 0
        %843 = vmatprep.subr.bf16.mxu0 0
        %844 = vmatpush1.bf16.msra.mxu0 0
        %845 = vmatprep.subr.bf16.mxu0 0
        %846 = vmatpush1.bf16.msra.mxu0 0
        %847 = vmatprep.subr.bf16.mxu0 0
        %848 = vmatpush1.bf16.msra.mxu0 0
        %849 = vmatprep.subr.bf16.mxu0 0
        %850 = vmatpush1.bf16.msra.mxu0 0
        %851 = vmatprep.subr.bf16.mxu0 0
        %852 = vmatpush1.bf16.msra.mxu0 0
        %853 = vmatprep.subr.bf16.mxu0 0
        %854 = vmatpush1.bf16.msra.mxu0 %v834
        %855 = vmatprep.subr.bf16.mxu0 0
        %856 = vmatpush2.bf16.msra.mxu0 0
        %857 = vmatprep.subr.bf16.mxu0 0
        %858 = vmatpush2.bf16.msra.mxu0 0
        %859 = vmatprep.subr.bf16.mxu0 0
        %860 = vmatpush2.bf16.msra.mxu0 0
        %861 = vmatprep.subr.bf16.mxu0 0
        %862 = vmatpush2.bf16.msra.mxu0 0
        %863 = vmatprep.subr.bf16.mxu0 0
        %864 = vmatpush2.bf16.msra.mxu0 0
        %865 = vmatprep.subr.bf16.mxu0 0
        %866 = vmatpush2.bf16.msra.mxu0 0
        %867 = vmatprep.subr.bf16.mxu0 0
        %868 = vmatpush2.bf16.msra.mxu0 0
        %869 = vmatprep.subr.bf16.mxu0 0
        %870 = vmatpush2.bf16.msra.mxu0 0
        %871 = vmatprep.mubr.bf16.mxu0 0
        %872 = vmatmul.mubr.bf16.gmra.mxu0 %v837
        %v873 = vpop.f32.mrf.mxu0
        %v874 = vadd.f32 0.0, %v873
        %v875 = vpop.f32.mrf.mxu0
        %v876 = vpop.f32.mrf.mxu0
        %v877 = vadd.f32 0.0, %v876
        %v878 = vpop.f32.mrf.mxu0
        %879 = vdwg.mxu0
        %v880 = vld [vmem:[#allocation11] sm:$0xf]
        %v881 = vld [vmem:[#allocation11 + $0x4] sm:$0xf]
        %v884 = vunpack.c.l.b16 %v880
        %v885 = vunpack.c.l.b16 %v881
        %v886 = vpack.c.b16 %v885, %v884
        %888 = vrot.lane.b32.xlu0 %v821, 124
        %v889 = vpop.permute.xlu0 %888
        %v892 = vsel %vm807, %v886, 0
        %894 = vmatprep.subr.bf16.mxu0 0
        %895 = vmatpush1.bf16.msra.mxu0 0
        %896 = vmatprep.subr.bf16.mxu0 0
        %897 = vmatpush1.bf16.msra.mxu0 0
        %898 = vmatprep.subr.bf16.mxu0 0
        %899 = vmatpush1.bf16.msra.mxu0 0
        %900 = vmatprep.subr.bf16.mxu0 0
        %901 = vmatpush1.bf16.msra.mxu0 0
        %902 = vmatprep.subr.bf16.mxu0 0
        %903 = vmatpush1.bf16.msra.mxu0 0
        %904 = vmatprep.subr.bf16.mxu0 0
        %905 = vmatpush1.bf16.msra.mxu0 0
        %906 = vmatprep.subr.bf16.mxu0 0
        %907 = vmatpush1.bf16.msra.mxu0 0
        %908 = vmatprep.subr.bf16.mxu0 0
        %909 = vmatpush1.bf16.msra.mxu0 %v889
        %910 = vmatprep.subr.bf16.mxu0 0
        %911 = vmatpush2.bf16.msra.mxu0 0
        %912 = vmatprep.subr.bf16.mxu0 0
        %913 = vmatpush2.bf16.msra.mxu0 0
        %914 = vmatprep.subr.bf16.mxu0 0
        %915 = vmatpush2.bf16.msra.mxu0 0
        %916 = vmatprep.subr.bf16.mxu0 0
        %917 = vmatpush2.bf16.msra.mxu0 0
        %918 = vmatprep.subr.bf16.mxu0 0
        %919 = vmatpush2.bf16.msra.mxu0 0
        %920 = vmatprep.subr.bf16.mxu0 0
        %921 = vmatpush2.bf16.msra.mxu0 0
        %922 = vmatprep.subr.bf16.mxu0 0
        %923 = vmatpush2.bf16.msra.mxu0 0
        %924 = vmatprep.subr.bf16.mxu0 0
        %925 = vmatpush2.bf16.msra.mxu0 0
        %926 = vmatprep.mubr.bf16.mxu0 0
        %927 = vmatmul.mubr.bf16.gmra.mxu0 %v892
        %v928 = vpop.f32.mrf.mxu0
        %v929 = vadd.f32 0.0, %v928
        %v930 = vpop.f32.mrf.mxu0
        %v931 = vpop.f32.mrf.mxu0
        %v932 = vadd.f32 0.0, %v931
        %v933 = vpop.f32.mrf.mxu0
        %934 = vdwg.mxu0
        %v935 = vld [vmem:[#allocation13] sm:$0xf]
        %v936 = vld [vmem:[#allocation13 + $0x4] sm:$0xf]
        %v939 = vunpack.c.l.b16 %v935
        %v940 = vunpack.c.l.b16 %v936
        %v941 = vpack.c.b16 %v940, %v939
        %943 = vrot.lane.b32.xlu0 %v824, 124
        %v944 = vpop.permute.xlu0 %943
        %v947 = vsel %vm807, %v941, 0
        %949 = vmatprep.subr.bf16.mxu0 0
        %950 = vmatpush1.bf16.msra.mxu0 0
        %951 = vmatprep.subr.bf16.mxu0 0
        %952 = vmatpush1.bf16.msra.mxu0 0
        %953 = vmatprep.subr.bf16.mxu0 0
        %954 = vmatpush1.bf16.msra.mxu0 0
        %955 = vmatprep.subr.bf16.mxu0 0
        %956 = vmatpush1.bf16.msra.mxu0 0
        %957 = vmatprep.subr.bf16.mxu0 0
        %958 = vmatpush1.bf16.msra.mxu0 0
        %959 = vmatprep.subr.bf16.mxu0 0
        %960 = vmatpush1.bf16.msra.mxu0 0
        %961 = vmatprep.subr.bf16.mxu0 0
        %962 = vmatpush1.bf16.msra.mxu0 0
        %963 = vmatprep.subr.bf16.mxu0 0
        %964 = vmatpush1.bf16.msra.mxu0 %v944
        %965 = vmatprep.subr.bf16.mxu0 0
        %966 = vmatpush2.bf16.msra.mxu0 0
        %967 = vmatprep.subr.bf16.mxu0 0
        %968 = vmatpush2.bf16.msra.mxu0 0
        %969 = vmatprep.subr.bf16.mxu0 0
        %970 = vmatpush2.bf16.msra.mxu0 0
        %971 = vmatprep.subr.bf16.mxu0 0
        %972 = vmatpush2.bf16.msra.mxu0 0
        %973 = vmatprep.subr.bf16.mxu0 0
        %974 = vmatpush2.bf16.msra.mxu0 0
        %975 = vmatprep.subr.bf16.mxu0 0
        %976 = vmatpush2.bf16.msra.mxu0 0
        %977 = vmatprep.subr.bf16.mxu0 0
        %978 = vmatpush2.bf16.msra.mxu0 0
        %979 = vmatprep.subr.bf16.mxu0 0
        %980 = vmatpush2.bf16.msra.mxu0 0
        %981 = vmatprep.mubr.bf16.mxu0 0
        %982 = vmatmul.mubr.bf16.gmra.mxu0 %v947
        %v983 = vpop.f32.mrf.mxu0
        %v984 = vadd.f32 0.0, %v983
        %v985 = vpop.f32.mrf.mxu0
        %v986 = vpop.f32.mrf.mxu0
        %v987 = vadd.f32 0.0, %v986
        %v988 = vpop.f32.mrf.mxu0
        %989 = vdwg.mxu0
        %v990 = vsub.f32 %v874, %v929
        %v991 = vsub.f32 %v877, %v932
        %v992 = vsub.f32 %v984, %v874
        %v993 = vsub.f32 %v987, %v877
        %v994 = vsub.f32 %v992, %v929
        %v995 = vsub.f32 %v993, %v932
        %v996 = vpack.c.bf16 %v991, %v990
        %v997 = vpack.c.bf16 %v995, %v994
        %v998 = vadd.f32 %v990, %v994
        %v999 = vadd.f32 %v991, %v995
        %v1000 = vpack.c.bf16 %v999, %v998
        %v1001 = vld [vmem:[#allocation14] sm:$0xf]
        %v1002 = vld [vmem:[#allocation14 + $0x4] sm:$0xf]
        %v1005 = vunpack.c.l.b16 %v1001
        %v1006 = vunpack.c.l.b16 %v1002
        %v1007 = vpack.c.b16 %v1006, %v1005
        %v1010 = vsel %vm807, %v996, 0
        %1012 = vmatprep.subr.bf16.mxu0 0
        %1013 = vmatpush1.bf16.msra.mxu0 0
        %1014 = vmatprep.subr.bf16.mxu0 0
        %1015 = vmatpush1.bf16.msra.mxu0 0
        %1016 = vmatprep.subr.bf16.mxu0 0
        %1017 = vmatpush1.bf16.msra.mxu0 0
        %1018 = vmatprep.subr.bf16.mxu0 0
        %1019 = vmatpush1.bf16.msra.mxu0 0
        %1020 = vmatprep.subr.bf16.mxu0 0
        %1021 = vmatpush1.bf16.msra.mxu0 0
        %1022 = vmatprep.subr.bf16.mxu0 0
        %1023 = vmatpush1.bf16.msra.mxu0 0
        %1024 = vmatprep.subr.bf16.mxu0 0
        %1025 = vmatpush1.bf16.msra.mxu0 0
        %1026 = vmatprep.subr.bf16.mxu0 0
        %1027 = vmatpush1.bf16.msra.mxu0 %v1007
        %1028 = vmatprep.subr.bf16.mxu0 0
        %1029 = vmatpush2.bf16.msra.mxu0 0
        %1030 = vmatprep.subr.bf16.mxu0 0
        %1031 = vmatpush2.bf16.msra.mxu0 0
        %1032 = vmatprep.subr.bf16.mxu0 0
        %1033 = vmatpush2.bf16.msra.mxu0 0
        %1034 = vmatprep.subr.bf16.mxu0 0
        %1035 = vmatpush2.bf16.msra.mxu0 0
        %1036 = vmatprep.subr.bf16.mxu0 0
        %1037 = vmatpush2.bf16.msra.mxu0 0
        %1038 = vmatprep.subr.bf16.mxu0 0
        %1039 = vmatpush2.bf16.msra.mxu0 0
        %1040 = vmatprep.subr.bf16.mxu0 0
        %1041 = vmatpush2.bf16.msra.mxu0 0
        %1042 = vmatprep.subr.bf16.mxu0 0
        %1043 = vmatpush2.bf16.msra.mxu0 0
        %1044 = vmatprep.mubr.bf16.mxu0 0
        %1045 = vmatmul.mubr.bf16.gmra.mxu0 %v1010
        %v1046 = vpop.f32.mrf.mxu0
        %v1047 = vadd.f32 0.0, %v1046
        %v1048 = vpop.f32.mrf.mxu0
        %v1049 = vpop.f32.mrf.mxu0
        %v1050 = vadd.f32 0.0, %v1049
        %v1051 = vpop.f32.mrf.mxu0
        %1052 = vdwg.mxu0
        %v1053 = vld [vmem:[%s9] sm:$0xf]
        %v1054 = vld [vmem:[%s9 + $0x4] sm:$0xf]
        %v1057 = vunpack.c.l.b16 %v1053
        %v1058 = vunpack.c.l.b16 %v1054
        %v1059 = vpack.c.b16 %v1058, %v1057
        %v1062 = vsel %vm807, %v997, 0
        %1064 = vmatprep.subr.bf16.mxu0 0
        %1065 = vmatpush1.bf16.msra.mxu0 0
        %1066 = vmatprep.subr.bf16.mxu0 0
        %1067 = vmatpush1.bf16.msra.mxu0 0
        %1068 = vmatprep.subr.bf16.mxu0 0
        %1069 = vmatpush1.bf16.msra.mxu0 0
        %1070 = vmatprep.subr.bf16.mxu0 0
        %1071 = vmatpush1.bf16.msra.mxu0 0
        %1072 = vmatprep.subr.bf16.mxu0 0
        %1073 = vmatpush1.bf16.msra.mxu0 0
        %1074 = vmatprep.subr.bf16.mxu0 0
        %1075 = vmatpush1.bf16.msra.mxu0 0
        %1076 = vmatprep.subr.bf16.mxu0 0
        %1077 = vmatpush1.bf16.msra.mxu0 0
        %1078 = vmatprep.subr.bf16.mxu0 0
        %1079 = vmatpush1.bf16.msra.mxu0 %v1059
        %1080 = vmatprep.subr.bf16.mxu0 0
        %1081 = vmatpush2.bf16.msra.mxu0 0
        %1082 = vmatprep.subr.bf16.mxu0 0
        %1083 = vmatpush2.bf16.msra.mxu0 0
        %1084 = vmatprep.subr.bf16.mxu0 0
        %1085 = vmatpush2.bf16.msra.mxu0 0
        %1086 = vmatprep.subr.bf16.mxu0 0
        %1087 = vmatpush2.bf16.msra.mxu0 0
        %1088 = vmatprep.subr.bf16.mxu0 0
        %1089 = vmatpush2.bf16.msra.mxu0 0
        %1090 = vmatprep.subr.bf16.mxu0 0
        %1091 = vmatpush2.bf16.msra.mxu0 0
        %1092 = vmatprep.subr.bf16.mxu0 0
        %1093 = vmatpush2.bf16.msra.mxu0 0
        %1094 = vmatprep.subr.bf16.mxu0 0
        %1095 = vmatpush2.bf16.msra.mxu0 0
        %1096 = vmatprep.mubr.bf16.mxu0 0
        %1097 = vmatmul.mubr.bf16.gmra.mxu0 %v1062
        %v1098 = vpop.f32.mrf.mxu0
        %v1099 = vadd.f32 0.0, %v1098
        %v1100 = vpop.f32.mrf.mxu0
        %v1101 = vpop.f32.mrf.mxu0
        %v1102 = vadd.f32 0.0, %v1101
        %v1103 = vpop.f32.mrf.mxu0
        %1104 = vdwg.mxu0
        %v1105 = vld [vmem:[#allocation16] sm:$0xf]
        %v1106 = vld [vmem:[#allocation16 + $0x4] sm:$0xf]
        %v1109 = vunpack.c.l.b16 %v1105
        %v1110 = vunpack.c.l.b16 %v1106
        %v1111 = vpack.c.b16 %v1110, %v1109
        %v1114 = vsel %vm807, %v1000, 0
        %1116 = vmatprep.subr.bf16.mxu0 0
        %1117 = vmatpush1.bf16.msra.mxu0 0
        %1118 = vmatprep.subr.bf16.mxu0 0
        %1119 = vmatpush1.bf16.msra.mxu0 0
        %1120 = vmatprep.subr.bf16.mxu0 0
        %1121 = vmatpush1.bf16.msra.mxu0 0
        %1122 = vmatprep.subr.bf16.mxu0 0
        %1123 = vmatpush1.bf16.msra.mxu0 0
        %1124 = vmatprep.subr.bf16.mxu0 0
        %1125 = vmatpush1.bf16.msra.mxu0 0
        %1126 = vmatprep.subr.bf16.mxu0 0
        %1127 = vmatpush1.bf16.msra.mxu0 0
        %1128 = vmatprep.subr.bf16.mxu0 0
        %1129 = vmatpush1.bf16.msra.mxu0 0
        %1130 = vmatprep.subr.bf16.mxu0 0
        %1131 = vmatpush1.bf16.msra.mxu0 %v1111
        %1132 = vmatprep.subr.bf16.mxu0 0
        %1133 = vmatpush2.bf16.msra.mxu0 0
        %1134 = vmatprep.subr.bf16.mxu0 0
        %1135 = vmatpush2.bf16.msra.mxu0 0
        %1136 = vmatprep.subr.bf16.mxu0 0
        %1137 = vmatpush2.bf16.msra.mxu0 0
        %1138 = vmatprep.subr.bf16.mxu0 0
        %1139 = vmatpush2.bf16.msra.mxu0 0
        %1140 = vmatprep.subr.bf16.mxu0 0
        %1141 = vmatpush2.bf16.msra.mxu0 0
        %1142 = vmatprep.subr.bf16.mxu0 0
        %1143 = vmatpush2.bf16.msra.mxu0 0
        %1144 = vmatprep.subr.bf16.mxu0 0
        %1145 = vmatpush2.bf16.msra.mxu0 0
        %1146 = vmatprep.subr.bf16.mxu0 0
        %1147 = vmatpush2.bf16.msra.mxu0 0
        %1148 = vmatprep.mubr.bf16.mxu0 0
        %1149 = vmatmul.mubr.bf16.gmra.mxu0 %v1114
        %v1150 = vpop.f32.mrf.mxu0
        %v1151 = vadd.f32 0.0, %v1150
        %v1152 = vpop.f32.mrf.mxu0
        %v1153 = vpop.f32.mrf.mxu0
        %v1154 = vadd.f32 0.0, %v1153
        %v1155 = vpop.f32.mrf.mxu0
        %1156 = vdwg.mxu0
        %v1157 = vsub.f32 %v1047, %v1099
        %v1158 = vsub.f32 %v1050, %v1102
        %v1159 = vsub.f32 %v1151, %v1047
        %v1160 = vsub.f32 %v1154, %v1050
        %v1161 = vsub.f32 %v1159, %v1099
        %v1162 = vsub.f32 %v1160, %v1102
        %v1163 = vpack.c.bf16 %v1158, %v1157
        %v1165 = vunpack.c.l.b16 %v1163
        %v1166 = vunpack.c.h.b16 %v1163
        %v1167 = vpack.c.b16 %v1165, %v1165
        %v1168 = vpack.c.b16 %v1166, %v1166
        %vm1171 = vcmask 125952
        %1172 = vst.msk [vmem:[%s723] sm:$0xf] %vm1171, %v1167
        %1173 = vst.msk [vmem:[%s723 + $0x4] sm:$0xf] %vm1171, %v1168
        %v1174 = vpack.c.bf16 %v1162, %v1161
        %v1176 = vunpack.c.l.b16 %v1174
        %v1177 = vunpack.c.h.b16 %v1174
        %v1178 = vpack.c.b16 %v1176, %v1176
        %v1179 = vpack.c.b16 %v1177, %v1177
        %1182 = vst.msk [vmem:[%s730] sm:$0xf] %vm1171, %v1178
        %1183 = vst.msk [vmem:[%s730 + $0x4] sm:$0xf] %vm1171, %v1179
        %v1184 = vmul.f32 %v1157, %v1157
        %v1185 = vmul.f32 %v1158, %v1158
        %v1186 = vmul.f32 %v1161, %v1161
        %v1187 = vmul.f32 %v1162, %v1162
        %v1188 = vadd.f32 %v1184, %v1186
        %v1189 = vadd.f32 %v1185, %v1187
        %v1190 = vrsqrt.pop %v1188
        %v1191 = vmul.f32 %v1188, %v1190
        %vm1192 = vcmp.eq.f32.partialorder %v1188, inf
        %v1193 = vsel %vm1192, %v1188, %v1191
        %vm1194 = vcmp.eq.f32.partialorder %v1188, 0.0
        %v1195 = vand.u32 %v1188, 2147483648
        %v1196 = vsel %vm1194, %v1195, %v1193
        %v1197 = vrsqrt.pop %v1189
        %v1198 = vmul.f32 %v1189, %v1197
        %vm1199 = vcmp.eq.f32.partialorder %v1189, inf
        %v1200 = vsel %vm1199, %v1189, %v1198
        %vm1201 = vcmp.eq.f32.partialorder %v1189, 0.0
        %v1202 = vand.u32 %v1189, 2147483648
        %v1203 = vsel %vm1201, %v1202, %v1200
        %v1204 = vpack.c.bf16 %v1203, %v1196
        %v1206 = vunpack.c.l.b16 %v1204
        %v1207 = vunpack.c.h.b16 %v1204
        %v1208 = vpack.c.b16 %v1206, %v1206
        %v1209 = vpack.c.b16 %v1207, %v1207
        %1212 = vst.msk [vmem:[%s737] sm:$0xf] %vm1171, %v1208
        %1213 = vst.msk [vmem:[%s737 + $0x4] sm:$0xf] %vm1171, %v1209
        %1214 = vst.msk [vmem:[%s744] sm:$0xff] %vm807, %v1188
        %1215 = vst.msk [vmem:[%s744 + $0x8] sm:$0xff] %vm807, %v1189
        %s1216 = sand.u32 %s303, 1
        %s1217 = scalar_lea.sflag [#allocation4], %s1216
        %s1218 = sand.u32 %s303, 1
        %s1219 = smul.addr %s1218, 16
        %s1220 = scalar_lea.vmem [#allocation17], %s1219
        %s1221 = sand.u32 %s49, 1
        %s1222 = scalar_lea.sflag [#allocation19], %s1221
        %s1223 = sand.u32 %s329, 1
        %s1224 = smul.addr %s1223, 16
        %s1225 = scalar_lea.vmem [#allocation18], %s1224
        %s1226 = sand.u32 %s49, 1
        %s1227 = scalar_lea.sflag [#allocation19], %s1226
        %s1228 = sand.u32 %s355, 1
        %s1229 = smul.addr %s1228, 8
        %s1230 = scalar_lea.vmem [#allocation20], %s1229
        %s1231 = sand.u32 %s49, 1
        %s1232 = scalar_lea.sflag [#allocation22], %s1231
        %s1233 = sand.u32 %s381, 1
        %s1234 = smul.addr %s1233, 8
        %s1235 = scalar_lea.vmem [#allocation21], %s1234
        %s1236 = sand.u32 %s49, 1
        %s1237 = scalar_lea.sflag [#allocation22], %s1236
        %s1238 = sand.u32 %s407, 1
        %s1239 = smul.addr %s1238, 8
        %s1240 = scalar_lea.vmem [#allocation23], %s1239
        %s1241 = sand.u32 %s433, 1
        %s1242 = scalar_lea.sflag [#allocation25], %s1241
        %s1243 = sand.u32 %s433, 1
        %s1244 = smul.addr %s1243, 16
        %s1245 = scalar_lea.vmem [#allocation24], %s1244
        // Predicated region
        $region101: #{tpu_custom_call.1} parent=63 // pred_check
          %p1246 = pneg %p313
        $region102: #{tpu_custom_call.1} parent=63 // pred_check_branch
          %1248 = sbr.rel (%p1246) target = $region104
        $region103: #{tpu_custom_call.1} parent=63 // pred_region
          %s1250 = ssub.s32 256, 256
          %1251 = vsyncadd %s1217, %s1250
          %s1252 = smul.addr %s49, 2
          %s1253 = smul.addr %s1252, 128
          %s1254 = scalar_lea.hbm %s11, %s1253
          %s1255 = sshll.u32 %s1220, 4
          %s1256 = int_to_ptr.vmem [resolvable:$true] %s1255
          %1261 = dma.vmem_to_hbm [thread:$0]  %s1256, 256, %s1254, %s1217, 128, 128, 8
        $region104: #{tpu_custom_call.1} parent=63 // pred_fallthru
          _
        // Predicated region
        $region105: #{tpu_custom_call.1} parent=63 // pred_check
          %p1262 = pneg %p339
        $region106: #{tpu_custom_call.1} parent=63 // pred_check_branch
          %1264 = sbr.rel (%p1262) target = $region108
        $region107: #{tpu_custom_call.1} parent=63 // pred_region
          %s1266 = ssub.s32 256, 256
          %1267 = vsyncadd %s1222, %s1266
          %s1268 = smul.addr %s49, 2
          %s1269 = smul.addr %s1268, 128
          %s1270 = scalar_lea.hbm %s12, %s1269
          %s1271 = sshll.u32 %s1225, 4
          %s1272 = int_to_ptr.vmem [resolvable:$true] %s1271
          %1277 = dma.vmem_to_hbm [thread:$0]  %s1272, 256, %s1270, %s1222, 128, 128, 8
        $region108: #{tpu_custom_call.1} parent=63 // pred_fallthru
          _
        // Predicated region
        $region109: #{tpu_custom_call.1} parent=63 // pred_check
          %p1278 = pneg %p365
        $region110: #{tpu_custom_call.1} parent=63 // pred_check_branch
          %1280 = sbr.rel (%p1278) target = $region112
        $region111: #{tpu_custom_call.1} parent=63 // pred_region
          %s1282 = ssub.s32 128, 128
          %1283 = vsyncadd %s1227, %s1282
          %s1284 = smul.addr %s49, 2
          %s1285 = smul.addr %s1284, 64
          %s1286 = scalar_lea.hbm %s13, %s1285
          %s1287 = sshll.u32 %s1230, 4
          %s1288 = int_to_ptr.vmem [resolvable:$true] %s1287
          %1293 = dma.vmem_to_hbm [thread:$0]  %s1288, 128, %s1286, %s1227, 64, 64, 4
        $region112: #{tpu_custom_call.1} parent=63 // pred_fallthru
          _
        // Predicated region
        $region113: #{tpu_custom_call.1} parent=63 // pred_check
          %p1294 = pneg %p391
        $region114: #{tpu_custom_call.1} parent=63 // pred_check_branch
          %1296 = sbr.rel (%p1294) target = $region116
        $region115: #{tpu_custom_call.1} parent=63 // pred_region
          %s1298 = ssub.s32 128, 128
          %1299 = vsyncadd %s1232, %s1298
          %s1300 = smul.addr %s49, 2
          %s1301 = smul.addr %s1300, 64
          %s1302 = scalar_lea.hbm %s14, %s1301
          %s1303 = sshll.u32 %s1235, 4
          %s1304 = int_to_ptr.vmem [resolvable:$true] %s1303
          %1309 = dma.vmem_to_hbm [thread:$0]  %s1304, 128, %s1302, %s1232, 64, 64, 4
        $region116: #{tpu_custom_call.1} parent=63 // pred_fallthru
          _
        // Predicated region
        $region117: #{tpu_custom_call.1} parent=63 // pred_check
          %p1310 = pneg %p417
        $region118: #{tpu_custom_call.1} parent=63 // pred_check_branch
          %1312 = sbr.rel (%p1310) target = $region120
        $region119: #{tpu_custom_call.1} parent=63 // pred_region
          %s1314 = ssub.s32 128, 128
          %1315 = vsyncadd %s1237, %s1314
          %s1316 = smul.addr %s49, 2
          %s1317 = smul.addr %s1316, 64
          %s1318 = scalar_lea.hbm %s15, %s1317
          %s1319 = sshll.u32 %s1240, 4
          %s1320 = int_to_ptr.vmem [resolvable:$true] %s1319
          %1325 = dma.vmem_to_hbm [thread:$0]  %s1320, 128, %s1318, %s1237, 64, 64, 4
        $region120: #{tpu_custom_call.1} parent=63 // pred_fallthru
          _
        // Predicated region
        $region121: #{tpu_custom_call.1} parent=63 // pred_check
          %p1326 = pneg %p443
        $region122: #{tpu_custom_call.1} parent=63 // pred_check_branch
          %1328 = sbr.rel (%p1326) target = $region124
        $region123: #{tpu_custom_call.1} parent=63 // pred_region
          %s1330 = ssub.s32 256, 256
          %1331 = vsyncadd %s1242, %s1330
          %s1332 = smul.addr %s49, 2
          %s1333 = smul.addr %s1332, 128
          %s1334 = scalar_lea.hbm %s16, %s1333
          %s1335 = sshll.u32 %s1245, 4
          %s1336 = int_to_ptr.vmem [resolvable:$true] %s1335
          %1341 = dma.vmem_to_hbm [thread:$0]  %s1336, 256, %s1334, %s1242, 128, 128, 8
        $region124: #{tpu_custom_call.1} parent=63 // pred_fallthru
          _
      $region64: #{tpu_custom_call.1} parent=5 // pred_fallthru
        _
      %p1342 = scmp.le.s32.totalorder 2, %s44
      // Predicated region
      $region125: #{tpu_custom_call.1} parent=5 // pred_check
        %p1343 = pneg %p1342
      $region126: #{tpu_custom_call.1} parent=5 // pred_check_branch
        %1345 = sbr.rel (%p1343) target = $region128
      $region127: #{tpu_custom_call.1} parent=5 // pred_region
        %s1346 = ssub.s32 %s44, 2
        // Predicated region
        $region129: #{tpu_custom_call.1} parent=127 // pred_check
          %p1347 = pneg %p319
        $region130: #{tpu_custom_call.1} parent=127 // pred_check_branch
          %1349 = sbr.rel (%p1347) target = $region132
        $region131: #{tpu_custom_call.1} parent=127 // pred_region
          %s1350 = sand.u32 %s304, 1
          %s1351 = scalar_lea.sflag [#allocation4], %s1350
          %s1352 = sand.u32 %s304, 1
          %s1353 = smul.addr %s1352, 16
          %s1354 = scalar_lea.vmem [#allocation17], %s1353
          %1355 = dma.done %s1351, 256
        $region132: #{tpu_custom_call.1} parent=127 // pred_fallthru
          _
        // Predicated region
        $region133: #{tpu_custom_call.1} parent=127 // pred_check
          %p1356 = pneg %p345
        $region134: #{tpu_custom_call.1} parent=127 // pred_check_branch
          %1358 = sbr.rel (%p1356) target = $region136
        $region135: #{tpu_custom_call.1} parent=127 // pred_region
          %s1359 = sand.u32 %s50, 1
          %s1360 = scalar_lea.sflag [#allocation19], %s1359
          %s1361 = sand.u32 %s330, 1
          %s1362 = smul.addr %s1361, 16
          %s1363 = scalar_lea.vmem [#allocation18], %s1362
          %1364 = dma.done %s1360, 256
        $region136: #{tpu_custom_call.1} parent=127 // pred_fallthru
          _
        // Predicated region
        $region137: #{tpu_custom_call.1} parent=127 // pred_check
          %p1365 = pneg %p371
        $region138: #{tpu_custom_call.1} parent=127 // pred_check_branch
          %1367 = sbr.rel (%p1365) target = $region140
        $region139: #{tpu_custom_call.1} parent=127 // pred_region
          %s1368 = sand.u32 %s50, 1
          %s1369 = scalar_lea.sflag [#allocation19], %s1368
          %s1370 = sand.u32 %s356, 1
          %s1371 = smul.addr %s1370, 8
          %s1372 = scalar_lea.vmem [#allocation20], %s1371
          %1373 = dma.done %s1369, 128
        $region140: #{tpu_custom_call.1} parent=127 // pred_fallthru
          _
        // Predicated region
        $region141: #{tpu_custom_call.1} parent=127 // pred_check
          %p1374 = pneg %p397
        $region142: #{tpu_custom_call.1} parent=127 // pred_check_branch
          %1376 = sbr.rel (%p1374) target = $region144
        $region143: #{tpu_custom_call.1} parent=127 // pred_region
          %s1377 = sand.u32 %s50, 1
          %s1378 = scalar_lea.sflag [#allocation22], %s1377
          %s1379 = sand.u32 %s382, 1
          %s1380 = smul.addr %s1379, 8
          %s1381 = scalar_lea.vmem [#allocation21], %s1380
          %1382 = dma.done %s1378, 128
        $region144: #{tpu_custom_call.1} parent=127 // pred_fallthru
          _
        // Predicated region
        $region145: #{tpu_custom_call.1} parent=127 // pred_check
          %p1383 = pneg %p423
        $region146: #{tpu_custom_call.1} parent=127 // pred_check_branch
          %1385 = sbr.rel (%p1383) target = $region148
        $region147: #{tpu_custom_call.1} parent=127 // pred_region
          %s1386 = sand.u32 %s50, 1
          %s1387 = scalar_lea.sflag [#allocation22], %s1386
          %s1388 = sand.u32 %s408, 1
          %s1389 = smul.addr %s1388, 8
          %s1390 = scalar_lea.vmem [#allocation23], %s1389
          %1391 = dma.done %s1387, 128
        $region148: #{tpu_custom_call.1} parent=127 // pred_fallthru
          _
        // Predicated region
        $region149: #{tpu_custom_call.1} parent=127 // pred_check
          %p1392 = pneg %p449
        $region150: #{tpu_custom_call.1} parent=127 // pred_check_branch
          %1394 = sbr.rel (%p1392) target = $region152
        $region151: #{tpu_custom_call.1} parent=127 // pred_region
          %s1395 = sand.u32 %s434, 1
          %s1396 = scalar_lea.sflag [#allocation25], %s1395
          %s1397 = sand.u32 %s434, 1
          %s1398 = smul.addr %s1397, 16
          %s1399 = scalar_lea.vmem [#allocation24], %s1398
          %1400 = dma.done %s1396, 256
        $region152: #{tpu_custom_call.1} parent=127 // pred_fallthru
          _
      $region128: #{tpu_custom_call.1} parent=5 // pred_fallthru
        _
    $region6: #{tpu_custom_call.1} parent=1 // loop_footer
      %s48 = sadd.s32 1, %s44
    $region7: #{tpu_custom_call.1} parent=1 // loop_footer_branch
      %43 = sbr.rel target = $region3
    $region8: #{tpu_custom_call.1} parent=1 // loop_exit
      _
    %1401 = vsyncpa [#allocation3], 1
    %s1402 = scalar_lea.sflag [#allocation3], 1
    %1403 = vsyncpa %s1402, 1
    %1404 = vsyncpa [#allocation6], 1
    %s1405 = scalar_lea.sflag [#allocation6], 1
    %1406 = vsyncpa %s1405, 1
    %1407 = vsyncpa [#allocation9], 1
    %1408 = vsyncpa [#allocation12], 1
    %1409 = vsyncpa [#allocation15], 1
    %1410 = vsyncpa [#allocation4], 1
    %s1411 = scalar_lea.sflag [#allocation4], 1
    %1412 = vsyncpa %s1411, 1
    %1413 = vsyncpa [#allocation19], 1
    %s1414 = scalar_lea.sflag [#allocation19], 1
    %1415 = vsyncpa %s1414, 1
    %1416 = vsyncpa [#allocation22], 1
    %s1417 = scalar_lea.sflag [#allocation22], 1
    %1418 = vsyncpa %s1417, 1
    %1419 = vsyncpa [#allocation25], 1
    %s1420 = scalar_lea.sflag [#allocation25], 1
    %1421 = vsyncpa %s1420, 1

</llo_original>
